<compile_context>
chip_gen: v5e
topology: v5e:2x2
jax: 0.10.0
libtpu: 0.0.40
codegen_flags: <defaults>
</compile_context>

<pallas_src>
import jax
import jax.numpy as jnp
import numpy as np
from jax import lax
from jax.experimental import pallas as pl
from jax.experimental.pallas import tpu as pltpu


def _downsample_row_kernel(xe0_ref, xe1_ref, xe2_ref,
                           xo0_ref, xo1_ref, xo2_ref,
                           w_ref, b_ref, out_ref):
    """One grid step = one output row (all batches, all output columns).

    xe{d}_ref: (B, 1, We, C) bf16 -- padded row 2*i + d, even padded columns.
    xo{d}_ref: (B, 1, Wod, C) bf16 -- padded row 2*i + d, odd padded columns.
    w_ref:     (9, C, Np) bf16 -- tap (kh*3+kw) matrices, lane-padded C_out.
    b_ref:     (1, Np) f32 bias.
    out_ref:   (B, 1, Wo, Np) f32.
    """
    B, _, Wo, Np = out_ref.shape
    even_refs = (xe0_ref, xe1_ref, xe2_ref)
    odd_refs = (xo0_ref, xo1_ref, xo2_ref)
    bias = b_ref[...]                                   # (1, Np) f32

    def dot(a, wt):
        # (Wo, C) x (C, Np) -> (Wo, Np), bf16 operands, f32 accumulation on MXU.
        return lax.dot_general(a, wt, (((1,), (0,)), ((), ())),
                               preferred_element_type=jnp.float32)

    for b in range(B):                                  # static unroll over batch
        acc = jnp.zeros((Wo, Np), jnp.float32)
        for dh in range(3):
            xe = even_refs[dh][b, 0]                    # (We, C)  even cols
            xo = odd_refs[dh][b, 0]                     # (Wod, C) odd cols
            acc += dot(xe[0:Wo, :], w_ref[3 * dh + 0])      # kw=0 -> even col ow
            acc += dot(xo[0:Wo, :], w_ref[3 * dh + 1])      # kw=1 -> odd  col ow
            acc += dot(xe[1:Wo + 1, :], w_ref[3 * dh + 2])  # kw=2 -> even col ow+1
        out_ref[b, 0] = (acc + bias).astype(out_ref.dtype)


@jax.jit
def downsample(x_nchw, weight, bias):
    """ReflectionPad2d(1) followed by Conv2d(dim, dim, 3, stride=2).

    x_nchw: (B, C, H, W); weight: (C_out, C_in, 3, 3) (PyTorch layout);
    bias: (C_out,).  Returns (B, C_out, H_out, W_out) float32.
    """
    B, C, H, W = x_nchw.shape
    Co = weight.shape[0]
    Hp, Wp = H + 2, W + 2
    Ho = (Hp - 3) // 2 + 1
    Wo = (Wp - 3) // 2 + 1

    # --- glue (cheap, XLA-fused): NHWC, reflection pad, even/odd column split ---
    x = jnp.transpose(x_nchw, (0, 2, 3, 1))                               # NHWC
    x_pad = jnp.pad(x, ((0, 0), (1, 1), (1, 1), (0, 0)), mode="reflect")  # (B,Hp,Wp,C)
    xe = x_pad[:, :, 0::2, :].astype(jnp.bfloat16)                        # even padded cols
    xo = x_pad[:, :, 1::2, :].astype(jnp.bfloat16)                        # odd padded cols
    We = xe.shape[2]
    Wod = xo.shape[2]

    # --- pack weight/bias: tap-major (9, C, Np), lane-dense Np (multiple of 128) ---
    Np = ((Co + 127) // 128) * 128
    w_taps = jnp.transpose(weight, (2, 3, 1, 0)).reshape(9, C, Co)        # [kh*3+kw, ci, co]
    w_taps = jnp.pad(w_taps, ((0, 0), (0, 0), (0, Np - Co))).astype(jnp.bfloat16)
    b_row = jnp.pad(bias.astype(jnp.float32), (0, Np - Co)).reshape(1, Np)

    y = pl.pallas_call(
        _downsample_row_kernel,
        out_shape=jax.ShapeDtypeStruct((B, Ho, Wo, Np), jnp.float32),
        grid_spec=pltpu.PrefetchScalarGridSpec(
            num_scalar_prefetch=0,
            grid=(Ho,),
            in_specs=[
                # three padded rows (2i, 2i+1, 2i+2), even-column phase
                pl.BlockSpec((B, 1, We, C), lambda i: (0, 2 * i, 0, 0)),
                pl.BlockSpec((B, 1, We, C), lambda i: (0, 2 * i + 1, 0, 0)),
                pl.BlockSpec((B, 1, We, C), lambda i: (0, 2 * i + 2, 0, 0)),
                # same three padded rows, odd-column phase
                pl.BlockSpec((B, 1, Wod, C), lambda i: (0, 2 * i, 0, 0)),
                pl.BlockSpec((B, 1, Wod, C), lambda i: (0, 2 * i + 1, 0, 0)),
                pl.BlockSpec((B, 1, Wod, C), lambda i: (0, 2 * i + 2, 0, 0)),
                # weight / bias: constant index maps -> fetched into VMEM once.
                # (use pipeline_mode=pl.Buffered(1) to single-buffer at extreme C)
                pl.BlockSpec((9, C, Np), lambda i: (0, 0, 0)),
                pl.BlockSpec((1, Np), lambda i: (0, 0)),
            ],
            out_specs=pl.BlockSpec((B, 1, Wo, Np), lambda i: (0, i, 0, 0)),
        ),
        compiler_params=pltpu.CompilerParams(
            dimension_semantics=("parallel",),
        ),
    )(xe, xe, xe, xo, xo, xo, w_taps, b_row)

    y = y[..., :Co]                                   # drop lane padding
    return jnp.transpose(y, (0, 3, 1, 2))             # NHWC -> NCHW (module interface)


if __name__ == "__main__":
    key = jax.random.PRNGKey(0)
    k_x, k_w, k_b = jax.random.split(key, 3)

    B, C, H, W = 2, 4, 16, 16
    dim = C
    x = jax.random.normal(k_x, (B, C, H, W), jnp.float32)

    # Deterministic params with the same shapes as nn.Conv2d(dim, dim, 3, stride=2).
    bound = 1.0 / float(np.sqrt(dim * 3 * 3))
    weight = jax.random.uniform(k_w, (dim, dim, 3, 3), jnp.float32, -bound, bound)
    bias = jax.random.uniform(k_b, (dim,), jnp.float32, -bound, bound)

    y = jax.block_until_ready(downsample(x, weight, bias))
    assert y.shape == (B, dim, H // 2, W // 2), y.shape

    # Reference: ReflectionPad2d(1) + Conv2d(3x3, stride 2).  Inputs/weights are
    # rounded to bf16 exactly like the kernel does; accumulation is f32 in both.
    xq = x.astype(jnp.bfloat16).astype(jnp.float32)
    wq = weight.astype(jnp.bfloat16).astype(jnp.float32)
    x_pad_ref = jnp.pad(xq, ((0, 0), (0, 0), (1, 1), (1, 1)), mode="reflect")
    y_ref = lax.conv_general_dilated(
        x_pad_ref, wq, window_strides=(2, 2), padding="VALID",
        dimension_numbers=("NCHW", "OIHW", "NCHW"),
        precision=lax.Precision.HIGHEST,
    ) + bias[None, :, None, None]
    np.testing.assert_allclose(np.asarray(y), np.asarray(y_ref), atol=2e-3, rtol=2e-3)

    print("KERNEL_OK")
</pallas_src>

<mosaic_0001>
module attributes {stable_mosaic.version = 11 : i64} {
  func.func @_downsample_row_kernel(%arg0: i32, %arg1: memref<2x1x9x4xbf16, #tpu.memory_space<vmem>>, %arg2: memref<2x1x9x4xbf16, #tpu.memory_space<vmem>>, %arg3: memref<2x1x9x4xbf16, #tpu.memory_space<vmem>>, %arg4: memref<2x1x9x4xbf16, #tpu.memory_space<vmem>>, %arg5: memref<2x1x9x4xbf16, #tpu.memory_space<vmem>>, %arg6: memref<2x1x9x4xbf16, #tpu.memory_space<vmem>>, %arg7: memref<9x4x128xbf16, #tpu.memory_space<vmem>>, %arg8: memref<1x128xf32, #tpu.memory_space<vmem>>, %arg9: memref<2x1x8x128xf32, #tpu.memory_space<vmem>>) attributes {dimension_semantics = [#tpu.dimension_semantics<parallel>], iteration_bounds = array<i64: 8>, scalar_prefetch = 0 : i64, scratch_operands = 0 : i64, tpu.core_type = #tpu.core_type<tc>, window_params = [{transform_indices = @transform_0, window_bounds = array<i64: 2, 1, 9, 4>}, {transform_indices = @transform_1, window_bounds = array<i64: 2, 1, 9, 4>}, {transform_indices = @transform_2, window_bounds = array<i64: 2, 1, 9, 4>}, {transform_indices = @transform_3, window_bounds = array<i64: 2, 1, 9, 4>}, {transform_indices = @transform_4, window_bounds = array<i64: 2, 1, 9, 4>}, {transform_indices = @transform_5, window_bounds = array<i64: 2, 1, 9, 4>}, {pipeline_mode = #tpu.pipeline_mode<synchronous>, transform_indices = @transform_6, window_bounds = array<i64: 9, 4, 128>}, {pipeline_mode = #tpu.pipeline_mode<synchronous>, transform_indices = @transform_7, window_bounds = array<i64: 1, 128>}, {transform_indices = @transform_8, window_bounds = array<i64: 2, 1, 8, 128>}]} {
    %c0 = arith.constant 0 : index
    %c0_0 = arith.constant 0 : index
    %0 = vector.load %arg8[%c0, %c0_0] : memref<1x128xf32, #tpu.memory_space<vmem>>, vector<1x128xf32>
    %cst = arith.constant 0.000000e+00 : f32
    %1 = vector.broadcast %cst : f32 to vector<8x128xf32>
    %c0_1 = arith.constant 0 : index
    %c0_2 = arith.constant 0 : index
    %c0_3 = arith.constant 0 : index
    %c0_4 = arith.constant 0 : index
    %2 = vector.load %arg1[%c0_1, %c0_2, %c0_3, %c0_4] : memref<2x1x9x4xbf16, #tpu.memory_space<vmem>>, vector<1x1x9x4xbf16>
    %3 = vector.shape_cast %2 : vector<1x1x9x4xbf16> to vector<9x4xbf16>
    %c0_5 = arith.constant 0 : index
    %c0_6 = arith.constant 0 : index
    %c0_7 = arith.constant 0 : index
    %c0_8 = arith.constant 0 : index
    %4 = vector.load %arg4[%c0_5, %c0_6, %c0_7, %c0_8] : memref<2x1x9x4xbf16, #tpu.memory_space<vmem>>, vector<1x1x9x4xbf16>
    %5 = vector.shape_cast %4 : vector<1x1x9x4xbf16> to vector<9x4xbf16>
    %6 = vector.extract_strided_slice %3 {offsets = [0, 0], sizes = [8, 4], strides = [1, 1]} : vector<9x4xbf16> to vector<8x4xbf16>
    %c0_9 = arith.constant 0 : index
    %c0_10 = arith.constant 0 : index
    %c0_11 = arith.constant 0 : index
    %7 = vector.load %arg7[%c0_9, %c0_10, %c0_11] : memref<9x4x128xbf16, #tpu.memory_space<vmem>>, vector<1x4x128xbf16>
    %8 = vector.shape_cast %7 : vector<1x4x128xbf16> to vector<4x128xbf16>
    %cst_12 = arith.constant dense<0.000000e+00> : vector<8x128xf32>
    %9 = tpu.matmul %6, %8, %cst_12 {dimension_numbers = #tpu.dot_dimension_numbers<[1], [0], [0], [1], [0, 0, 1, 1], [], []>} : vector<8x4xbf16>, vector<4x128xbf16>, vector<8x128xf32> -> vector<8x128xf32>
    %10 = arith.addf %1, %9 : vector<8x128xf32>
    %11 = vector.extract_strided_slice %5 {offsets = [0, 0], sizes = [8, 4], strides = [1, 1]} : vector<9x4xbf16> to vector<8x4xbf16>
    %c1 = arith.constant 1 : index
    %c0_13 = arith.constant 0 : index
    %c0_14 = arith.constant 0 : index
    %12 = vector.load %arg7[%c1, %c0_13, %c0_14] : memref<9x4x128xbf16, #tpu.memory_space<vmem>>, vector<1x4x128xbf16>
    %13 = vector.shape_cast %12 : vector<1x4x128xbf16> to vector<4x128xbf16>
    %cst_15 = arith.constant dense<0.000000e+00> : vector<8x128xf32>
    %14 = tpu.matmul %11, %13, %cst_15 {dimension_numbers = #tpu.dot_dimension_numbers<[1], [0], [0], [1], [0, 0, 1, 1], [], []>} : vector<8x4xbf16>, vector<4x128xbf16>, vector<8x128xf32> -> vector<8x128xf32>
    %15 = arith.addf %10, %14 : vector<8x128xf32>
    %16 = vector.extract_strided_slice %3 {offsets = [1, 0], sizes = [8, 4], strides = [1, 1]} : vector<9x4xbf16> to vector<8x4xbf16>
    %c2 = arith.constant 2 : index
    %c0_16 = arith.constant 0 : index
    %c0_17 = arith.constant 0 : index
    %17 = vector.load %arg7[%c2, %c0_16, %c0_17] : memref<9x4x128xbf16, #tpu.memory_space<vmem>>, vector<1x4x128xbf16>
    %18 = vector.shape_cast %17 : vector<1x4x128xbf16> to vector<4x128xbf16>
    %cst_18 = arith.constant dense<0.000000e+00> : vector<8x128xf32>
    %19 = tpu.matmul %16, %18, %cst_18 {dimension_numbers = #tpu.dot_dimension_numbers<[1], [0], [0], [1], [0, 0, 1, 1], [], []>} : vector<8x4xbf16>, vector<4x128xbf16>, vector<8x128xf32> -> vector<8x128xf32>
    %20 = arith.addf %15, %19 : vector<8x128xf32>
    %c0_19 = arith.constant 0 : index
    %c0_20 = arith.constant 0 : index
    %c0_21 = arith.constant 0 : index
    %c0_22 = arith.constant 0 : index
    %21 = vector.load %arg2[%c0_19, %c0_20, %c0_21, %c0_22] : memref<2x1x9x4xbf16, #tpu.memory_space<vmem>>, vector<1x1x9x4xbf16>
    %22 = vector.shape_cast %21 : vector<1x1x9x4xbf16> to vector<9x4xbf16>
    %c0_23 = arith.constant 0 : index
    %c0_24 = arith.constant 0 : index
    %c0_25 = arith.constant 0 : index
    %c0_26 = arith.constant 0 : index
    %23 = vector.load %arg5[%c0_23, %c0_24, %c0_25, %c0_26] : memref<2x1x9x4xbf16, #tpu.memory_space<vmem>>, vector<1x1x9x4xbf16>
    %24 = vector.shape_cast %23 : vector<1x1x9x4xbf16> to vector<9x4xbf16>
    %25 = vector.extract_strided_slice %22 {offsets = [0, 0], sizes = [8, 4], strides = [1, 1]} : vector<9x4xbf16> to vector<8x4xbf16>
    %c3 = arith.constant 3 : index
    %c0_27 = arith.constant 0 : index
    %c0_28 = arith.constant 0 : index
    %26 = vector.load %arg7[%c3, %c0_27, %c0_28] : memref<9x4x128xbf16, #tpu.memory_space<vmem>>, vector<1x4x128xbf16>
    %27 = vector.shape_cast %26 : vector<1x4x128xbf16> to vector<4x128xbf16>
    %cst_29 = arith.constant dense<0.000000e+00> : vector<8x128xf32>
    %28 = tpu.matmul %25, %27, %cst_29 {dimension_numbers = #tpu.dot_dimension_numbers<[1], [0], [0], [1], [0, 0, 1, 1], [], []>} : vector<8x4xbf16>, vector<4x128xbf16>, vector<8x128xf32> -> vector<8x128xf32>
    %29 = arith.addf %20, %28 : vector<8x128xf32>
    %30 = vector.extract_strided_slice %24 {offsets = [0, 0], sizes = [8, 4], strides = [1, 1]} : vector<9x4xbf16> to vector<8x4xbf16>
    %c4 = arith.constant 4 : index
    %c0_30 = arith.constant 0 : index
    %c0_31 = arith.constant 0 : index
    %31 = vector.load %arg7[%c4, %c0_30, %c0_31] : memref<9x4x128xbf16, #tpu.memory_space<vmem>>, vector<1x4x128xbf16>
    %32 = vector.shape_cast %31 : vector<1x4x128xbf16> to vector<4x128xbf16>
    %cst_32 = arith.constant dense<0.000000e+00> : vector<8x128xf32>
    %33 = tpu.matmul %30, %32, %cst_32 {dimension_numbers = #tpu.dot_dimension_numbers<[1], [0], [0], [1], [0, 0, 1, 1], [], []>} : vector<8x4xbf16>, vector<4x128xbf16>, vector<8x128xf32> -> vector<8x128xf32>
    %34 = arith.addf %29, %33 : vector<8x128xf32>
    %35 = vector.extract_strided_slice %22 {offsets = [1, 0], sizes = [8, 4], strides = [1, 1]} : vector<9x4xbf16> to vector<8x4xbf16>
    %c5 = arith.constant 5 : index
    %c0_33 = arith.constant 0 : index
    %c0_34 = arith.constant 0 : index
    %36 = vector.load %arg7[%c5, %c0_33, %c0_34] : memref<9x4x128xbf16, #tpu.memory_space<vmem>>, vector<1x4x128xbf16>
    %37 = vector.shape_cast %36 : vector<1x4x128xbf16> to vector<4x128xbf16>
    %cst_35 = arith.constant dense<0.000000e+00> : vector<8x128xf32>
    %38 = tpu.matmul %35, %37, %cst_35 {dimension_numbers = #tpu.dot_dimension_numbers<[1], [0], [0], [1], [0, 0, 1, 1], [], []>} : vector<8x4xbf16>, vector<4x128xbf16>, vector<8x128xf32> -> vector<8x128xf32>
    %39 = arith.addf %34, %38 : vector<8x128xf32>
    %c0_36 = arith.constant 0 : index
    %c0_37 = arith.constant 0 : index
    %c0_38 = arith.constant 0 : index
    %c0_39 = arith.constant 0 : index
    %40 = vector.load %arg3[%c0_36, %c0_37, %c0_38, %c0_39] : memref<2x1x9x4xbf16, #tpu.memory_space<vmem>>, vector<1x1x9x4xbf16>
    %41 = vector.shape_cast %40 : vector<1x1x9x4xbf16> to vector<9x4xbf16>
    %c0_40 = arith.constant 0 : index
    %c0_41 = arith.constant 0 : index
    %c0_42 = arith.constant 0 : index
    %c0_43 = arith.constant 0 : index
    %42 = vector.load %arg6[%c0_40, %c0_41, %c0_42, %c0_43] : memref<2x1x9x4xbf16, #tpu.memory_space<vmem>>, vector<1x1x9x4xbf16>
    %43 = vector.shape_cast %42 : vector<1x1x9x4xbf16> to vector<9x4xbf16>
    %44 = vector.extract_strided_slice %41 {offsets = [0, 0], sizes = [8, 4], strides = [1, 1]} : vector<9x4xbf16> to vector<8x4xbf16>
    %c6 = arith.constant 6 : index
    %c0_44 = arith.constant 0 : index
    %c0_45 = arith.constant 0 : index
    %45 = vector.load %arg7[%c6, %c0_44, %c0_45] : memref<9x4x128xbf16, #tpu.memory_space<vmem>>, vector<1x4x128xbf16>
    %46 = vector.shape_cast %45 : vector<1x4x128xbf16> to vector<4x128xbf16>
    %cst_46 = arith.constant dense<0.000000e+00> : vector<8x128xf32>
    %47 = tpu.matmul %44, %46, %cst_46 {dimension_numbers = #tpu.dot_dimension_numbers<[1], [0], [0], [1], [0, 0, 1, 1], [], []>} : vector<8x4xbf16>, vector<4x128xbf16>, vector<8x128xf32> -> vector<8x128xf32>
    %48 = arith.addf %39, %47 : vector<8x128xf32>
    %49 = vector.extract_strided_slice %43 {offsets = [0, 0], sizes = [8, 4], strides = [1, 1]} : vector<9x4xbf16> to vector<8x4xbf16>
    %c7 = arith.constant 7 : index
    %c0_47 = arith.constant 0 : index
    %c0_48 = arith.constant 0 : index
    %50 = vector.load %arg7[%c7, %c0_47, %c0_48] : memref<9x4x128xbf16, #tpu.memory_space<vmem>>, vector<1x4x128xbf16>
    %51 = vector.shape_cast %50 : vector<1x4x128xbf16> to vector<4x128xbf16>
    %cst_49 = arith.constant dense<0.000000e+00> : vector<8x128xf32>
    %52 = tpu.matmul %49, %51, %cst_49 {dimension_numbers = #tpu.dot_dimension_numbers<[1], [0], [0], [1], [0, 0, 1, 1], [], []>} : vector<8x4xbf16>, vector<4x128xbf16>, vector<8x128xf32> -> vector<8x128xf32>
    %53 = arith.addf %48, %52 : vector<8x128xf32>
    %54 = vector.extract_strided_slice %41 {offsets = [1, 0], sizes = [8, 4], strides = [1, 1]} : vector<9x4xbf16> to vector<8x4xbf16>
    %c8 = arith.constant 8 : index
    %c0_50 = arith.constant 0 : index
    %c0_51 = arith.constant 0 : index
    %55 = vector.load %arg7[%c8, %c0_50, %c0_51] : memref<9x4x128xbf16, #tpu.memory_space<vmem>>, vector<1x4x128xbf16>
    %56 = vector.shape_cast %55 : vector<1x4x128xbf16> to vector<4x128xbf16>
    %cst_52 = arith.constant dense<0.000000e+00> : vector<8x128xf32>
    %57 = tpu.matmul %54, %56, %cst_52 {dimension_numbers = #tpu.dot_dimension_numbers<[1], [0], [0], [1], [0, 0, 1, 1], [], []>} : vector<8x4xbf16>, vector<4x128xbf16>, vector<8x128xf32> -> vector<8x128xf32>
    %58 = arith.addf %53, %57 : vector<8x128xf32>
    %59 = vector.broadcast %0 : vector<1x128xf32> to vector<8x128xf32>
    %60 = arith.addf %58, %59 : vector<8x128xf32>
    %c0_53 = arith.constant 0 : index
    %c0_54 = arith.constant 0 : index
    %c0_55 = arith.constant 0 : index
    %c0_56 = arith.constant 0 : index
    %61 = vector.load %arg9[%c0_53, %c0_54, %c0_55, %c0_56] : memref<2x1x8x128xf32, #tpu.memory_space<vmem>>, vector<1x1x8x128xf32>
    %62 = vector.shape_cast %61 : vector<1x1x8x128xf32> to vector<8x128xf32>
    %63 = vector.shape_cast %60 : vector<8x128xf32> to vector<1x1x8x128xf32>
    tpu.vector_store %arg9[%c0_53, %c0_54, %c0_55, %c0_56], %63 {strides = array<i32>} : memref<2x1x8x128xf32, #tpu.memory_space<vmem>>, vector<1x1x8x128xf32>,
    %cst_57 = arith.constant 0.000000e+00 : f32
    %64 = vector.broadcast %cst_57 : f32 to vector<8x128xf32>
    %c1_58 = arith.constant 1 : index
    %c0_59 = arith.constant 0 : index
    %c0_60 = arith.constant 0 : index
    %c0_61 = arith.constant 0 : index
    %65 = vector.load %arg1[%c1_58, %c0_59, %c0_60, %c0_61] : memref<2x1x9x4xbf16, #tpu.memory_space<vmem>>, vector<1x1x9x4xbf16>
    %66 = vector.shape_cast %65 : vector<1x1x9x4xbf16> to vector<9x4xbf16>
    %c1_62 = arith.constant 1 : index
    %c0_63 = arith.constant 0 : index
    %c0_64 = arith.constant 0 : index
    %c0_65 = arith.constant 0 : index
    %67 = vector.load %arg4[%c1_62, %c0_63, %c0_64, %c0_65] : memref<2x1x9x4xbf16, #tpu.memory_space<vmem>>, vector<1x1x9x4xbf16>
    %68 = vector.shape_cast %67 : vector<1x1x9x4xbf16> to vector<9x4xbf16>
    %69 = vector.extract_strided_slice %66 {offsets = [0, 0], sizes = [8, 4], strides = [1, 1]} : vector<9x4xbf16> to vector<8x4xbf16>
    %c0_66 = arith.constant 0 : index
    %c0_67 = arith.constant 0 : index
    %c0_68 = arith.constant 0 : index
    %70 = vector.load %arg7[%c0_66, %c0_67, %c0_68] : memref<9x4x128xbf16, #tpu.memory_space<vmem>>, vector<1x4x128xbf16>
    %71 = vector.shape_cast %70 : vector<1x4x128xbf16> to vector<4x128xbf16>
    %cst_69 = arith.constant dense<0.000000e+00> : vector<8x128xf32>
    %72 = tpu.matmul %69, %71, %cst_69 {dimension_numbers = #tpu.dot_dimension_numbers<[1], [0], [0], [1], [0, 0, 1, 1], [], []>} : vector<8x4xbf16>, vector<4x128xbf16>, vector<8x128xf32> -> vector<8x128xf32>
    %73 = arith.addf %64, %72 : vector<8x128xf32>
    %74 = vector.extract_strided_slice %68 {offsets = [0, 0], sizes = [8, 4], strides = [1, 1]} : vector<9x4xbf16> to vector<8x4xbf16>
    %c1_70 = arith.constant 1 : index
    %c0_71 = arith.constant 0 : index
    %c0_72 = arith.constant 0 : index
    %75 = vector.load %arg7[%c1_70, %c0_71, %c0_72] : memref<9x4x128xbf16, #tpu.memory_space<vmem>>, vector<1x4x128xbf16>
    %76 = vector.shape_cast %75 : vector<1x4x128xbf16> to vector<4x128xbf16>
    %cst_73 = arith.constant dense<0.000000e+00> : vector<8x128xf32>
    %77 = tpu.matmul %74, %76, %cst_73 {dimension_numbers = #tpu.dot_dimension_numbers<[1], [0], [0], [1], [0, 0, 1, 1], [], []>} : vector<8x4xbf16>, vector<4x128xbf16>, vector<8x128xf32> -> vector<8x128xf32>
    %78 = arith.addf %73, %77 : vector<8x128xf32>
    %79 = vector.extract_strided_slice %66 {offsets = [1, 0], sizes = [8, 4], strides = [1, 1]} : vector<9x4xbf16> to vector<8x4xbf16>
    %c2_74 = arith.constant 2 : index
    %c0_75 = arith.constant 0 : index
    %c0_76 = arith.constant 0 : index
    %80 = vector.load %arg7[%c2_74, %c0_75, %c0_76] : memref<9x4x128xbf16, #tpu.memory_space<vmem>>, vector<1x4x128xbf16>
    %81 = vector.shape_cast %80 : vector<1x4x128xbf16> to vector<4x128xbf16>
    %cst_77 = arith.constant dense<0.000000e+00> : vector<8x128xf32>
    %82 = tpu.matmul %79, %81, %cst_77 {dimension_numbers = #tpu.dot_dimension_numbers<[1], [0], [0], [1], [0, 0, 1, 1], [], []>} : vector<8x4xbf16>, vector<4x128xbf16>, vector<8x128xf32> -> vector<8x128xf32>
    %83 = arith.addf %78, %82 : vector<8x128xf32>
    %c1_78 = arith.constant 1 : index
    %c0_79 = arith.constant 0 : index
    %c0_80 = arith.constant 0 : index
    %c0_81 = arith.constant 0 : index
    %84 = vector.load %arg2[%c1_78, %c0_79, %c0_80, %c0_81] : memref<2x1x9x4xbf16, #tpu.memory_space<vmem>>, vector<1x1x9x4xbf16>
    %85 = vector.shape_cast %84 : vector<1x1x9x4xbf16> to vector<9x4xbf16>
    %c1_82 = arith.constant 1 : index
    %c0_83 = arith.constant 0 : index
    %c0_84 = arith.constant 0 : index
    %c0_85 = arith.constant 0 : index
    %86 = vector.load %arg5[%c1_82, %c0_83, %c0_84, %c0_85] : memref<2x1x9x4xbf16, #tpu.memory_space<vmem>>, vector<1x1x9x4xbf16>
    %87 = vector.shape_cast %86 : vector<1x1x9x4xbf16> to vector<9x4xbf16>
    %88 = vector.extract_strided_slice %85 {offsets = [0, 0], sizes = [8, 4], strides = [1, 1]} : vector<9x4xbf16> to vector<8x4xbf16>
    %c3_86 = arith.constant 3 : index
    %c0_87 = arith.constant 0 : index
    %c0_88 = arith.constant 0 : index
    %89 = vector.load %arg7[%c3_86, %c0_87, %c0_88] : memref<9x4x128xbf16, #tpu.memory_space<vmem>>, vector<1x4x128xbf16>
    %90 = vector.shape_cast %89 : vector<1x4x128xbf16> to vector<4x128xbf16>
    %cst_89 = arith.constant dense<0.000000e+00> : vector<8x128xf32>
    %91 = tpu.matmul %88, %90, %cst_89 {dimension_numbers = #tpu.dot_dimension_numbers<[1], [0], [0], [1], [0, 0, 1, 1], [], []>} : vector<8x4xbf16>, vector<4x128xbf16>, vector<8x128xf32> -> vector<8x128xf32>
    %92 = arith.addf %83, %91 : vector<8x128xf32>
    %93 = vector.extract_strided_slice %87 {offsets = [0, 0], sizes = [8, 4], strides = [1, 1]} : vector<9x4xbf16> to vector<8x4xbf16>
    %c4_90 = arith.constant 4 : index
    %c0_91 = arith.constant 0 : index
    %c0_92 = arith.constant 0 : index
    %94 = vector.load %arg7[%c4_90, %c0_91, %c0_92] : memref<9x4x128xbf16, #tpu.memory_space<vmem>>, vector<1x4x128xbf16>
    %95 = vector.shape_cast %94 : vector<1x4x128xbf16> to vector<4x128xbf16>
    %cst_93 = arith.constant dense<0.000000e+00> : vector<8x128xf32>
    %96 = tpu.matmul %93, %95, %cst_93 {dimension_numbers = #tpu.dot_dimension_numbers<[1], [0], [0], [1], [0, 0, 1, 1], [], []>} : vector<8x4xbf16>, vector<4x128xbf16>, vector<8x128xf32> -> vector<8x128xf32>
    %97 = arith.addf %92, %96 : vector<8x128xf32>
    %98 = vector.extract_strided_slice %85 {offsets = [1, 0], sizes = [8, 4], strides = [1, 1]} : vector<9x4xbf16> to vector<8x4xbf16>
    %c5_94 = arith.constant 5 : index
    %c0_95 = arith.constant 0 : index
    %c0_96 = arith.constant 0 : index
    %99 = vector.load %arg7[%c5_94, %c0_95, %c0_96] : memref<9x4x128xbf16, #tpu.memory_space<vmem>>, vector<1x4x128xbf16>
    %100 = vector.shape_cast %99 : vector<1x4x128xbf16> to vector<4x128xbf16>
    %cst_97 = arith.constant dense<0.000000e+00> : vector<8x128xf32>
    %101 = tpu.matmul %98, %100, %cst_97 {dimension_numbers = #tpu.dot_dimension_numbers<[1], [0], [0], [1], [0, 0, 1, 1], [], []>} : vector<8x4xbf16>, vector<4x128xbf16>, vector<8x128xf32> -> vector<8x128xf32>
    %102 = arith.addf %97, %101 : vector<8x128xf32>
    %c1_98 = arith.constant 1 : index
    %c0_99 = arith.constant 0 : index
    %c0_100 = arith.constant 0 : index
    %c0_101 = arith.constant 0 : index
    %103 = vector.load %arg3[%c1_98, %c0_99, %c0_100, %c0_101] : memref<2x1x9x4xbf16, #tpu.memory_space<vmem>>, vector<1x1x9x4xbf16>
    %104 = vector.shape_cast %103 : vector<1x1x9x4xbf16> to vector<9x4xbf16>
    %c1_102 = arith.constant 1 : index
    %c0_103 = arith.constant 0 : index
    %c0_104 = arith.constant 0 : index
    %c0_105 = arith.constant 0 : index
    %105 = vector.load %arg6[%c1_102, %c0_103, %c0_104, %c0_105] : memref<2x1x9x4xbf16, #tpu.memory_space<vmem>>, vector<1x1x9x4xbf16>
    %106 = vector.shape_cast %105 : vector<1x1x9x4xbf16> to vector<9x4xbf16>
    %107 = vector.extract_strided_slice %104 {offsets = [0, 0], sizes = [8, 4], strides = [1, 1]} : vector<9x4xbf16> to vector<8x4xbf16>
    %c6_106 = arith.constant 6 : index
    %c0_107 = arith.constant 0 : index
    %c0_108 = arith.constant 0 : index
    %108 = vector.load %arg7[%c6_106, %c0_107, %c0_108] : memref<9x4x128xbf16, #tpu.memory_space<vmem>>, vector<1x4x128xbf16>
    %109 = vector.shape_cast %108 : vector<1x4x128xbf16> to vector<4x128xbf16>
    %cst_109 = arith.constant dense<0.000000e+00> : vector<8x128xf32>
    %110 = tpu.matmul %107, %109, %cst_109 {dimension_numbers = #tpu.dot_dimension_numbers<[1], [0], [0], [1], [0, 0, 1, 1], [], []>} : vector<8x4xbf16>, vector<4x128xbf16>, vector<8x128xf32> -> vector<8x128xf32>
    %111 = arith.addf %102, %110 : vector<8x128xf32>
    %112 = vector.extract_strided_slice %106 {offsets = [0, 0], sizes = [8, 4], strides = [1, 1]} : vector<9x4xbf16> to vector<8x4xbf16>
    %c7_110 = arith.constant 7 : index
    %c0_111 = arith.constant 0 : index
    %c0_112 = arith.constant 0 : index
    %113 = vector.load %arg7[%c7_110, %c0_111, %c0_112] : memref<9x4x128xbf16, #tpu.memory_space<vmem>>, vector<1x4x128xbf16>
    %114 = vector.shape_cast %113 : vector<1x4x128xbf16> to vector<4x128xbf16>
    %cst_113 = arith.constant dense<0.000000e+00> : vector<8x128xf32>
    %115 = tpu.matmul %112, %114, %cst_113 {dimension_numbers = #tpu.dot_dimension_numbers<[1], [0], [0], [1], [0, 0, 1, 1], [], []>} : vector<8x4xbf16>, vector<4x128xbf16>, vector<8x128xf32> -> vector<8x128xf32>
    %116 = arith.addf %111, %115 : vector<8x128xf32>
    %117 = vector.extract_strided_slice %104 {offsets = [1, 0], sizes = [8, 4], strides = [1, 1]} : vector<9x4xbf16> to vector<8x4xbf16>
    %c8_114 = arith.constant 8 : index
    %c0_115 = arith.constant 0 : index
    %c0_116 = arith.constant 0 : index
    %118 = vector.load %arg7[%c8_114, %c0_115, %c0_116] : memref<9x4x128xbf16, #tpu.memory_space<vmem>>, vector<1x4x128xbf16>
    %119 = vector.shape_cast %118 : vector<1x4x128xbf16> to vector<4x128xbf16>
    %cst_117 = arith.constant dense<0.000000e+00> : vector<8x128xf32>
    %120 = tpu.matmul %117, %119, %cst_117 {dimension_numbers = #tpu.dot_dimension_numbers<[1], [0], [0], [1], [0, 0, 1, 1], [], []>} : vector<8x4xbf16>, vector<4x128xbf16>, vector<8x128xf32> -> vector<8x128xf32>
    %121 = arith.addf %116, %120 : vector<8x128xf32>
    %122 = vector.broadcast %0 : vector<1x128xf32> to vector<8x128xf32>
    %123 = arith.addf %121, %122 : vector<8x128xf32>
    %c1_118 = arith.constant 1 : index
    %c0_119 = arith.constant 0 : index
    %c0_120 = arith.constant 0 : index
    %c0_121 = arith.constant 0 : index
    %124 = vector.load %arg9[%c1_118, %c0_119, %c0_120, %c0_121] : memref<2x1x8x128xf32, #tpu.memory_space<vmem>>, vector<1x1x8x128xf32>
    %125 = vector.shape_cast %124 : vector<1x1x8x128xf32> to vector<8x128xf32>
    %126 = vector.shape_cast %123 : vector<8x128xf32> to vector<1x1x8x128xf32>
    tpu.vector_store %arg9[%c1_118, %c0_119, %c0_120, %c0_121], %126 {strides = array<i32>} : memref<2x1x8x128xf32, #tpu.memory_space<vmem>>, vector<1x1x8x128xf32>,
    return
  }
  func.func @transform_0(%arg0: i32) -> (i32, i32, i32, i32) {
    %c2_i32 = arith.constant 2 : i32
    %0 = arith.muli %c2_i32, %arg0 : i32
    %c0_i32 = arith.constant 0 : i32
    %c0_i32_0 = arith.constant 0 : i32
    %c0_i32_1 = arith.constant 0 : i32
    %c0_i32_2 = arith.constant 0 : i32
    return %c0_i32, %0, %c0_i32_0, %c0_i32_1 : i32, i32, i32, i32
  }
  func.func @transform_1(%arg0: i32) -> (i32, i32, i32, i32) {
    %c2_i32 = arith.constant 2 : i32
    %0 = arith.muli %c2_i32, %arg0 : i32
    %c1_i32 = arith.constant 1 : i32
    %1 = arith.addi %0, %c1_i32 : i32
    %c0_i32 = arith.constant 0 : i32
    %c0_i32_0 = arith.constant 0 : i32
    %c0_i32_1 = arith.constant 0 : i32
    %c0_i32_2 = arith.constant 0 : i32
    return %c0_i32, %1, %c0_i32_0, %c0_i32_1 : i32, i32, i32, i32
  }
  func.func @transform_2(%arg0: i32) -> (i32, i32, i32, i32) {
    %c2_i32 = arith.constant 2 : i32
    %0 = arith.muli %c2_i32, %arg0 : i32
    %c2_i32_0 = arith.constant 2 : i32
    %1 = arith.addi %0, %c2_i32_0 : i32
    %c0_i32 = arith.constant 0 : i32
    %c0_i32_1 = arith.constant 0 : i32
    %c0_i32_2 = arith.constant 0 : i32
    %c0_i32_3 = arith.constant 0 : i32
    return %c0_i32, %1, %c0_i32_1, %c0_i32_2 : i32, i32, i32, i32
  }
  func.func @transform_3(%arg0: i32) -> (i32, i32, i32, i32) {
    %c2_i32 = arith.constant 2 : i32
    %0 = arith.muli %c2_i32, %arg0 : i32
    %c0_i32 = arith.constant 0 : i32
    %c0_i32_0 = arith.constant 0 : i32
    %c0_i32_1 = arith.constant 0 : i32
    %c0_i32_2 = arith.constant 0 : i32
    return %c0_i32, %0, %c0_i32_0, %c0_i32_1 : i32, i32, i32, i32
  }
  func.func @transform_4(%arg0: i32) -> (i32, i32, i32, i32) {
    %c2_i32 = arith.constant 2 : i32
    %0 = arith.muli %c2_i32, %arg0 : i32
    %c1_i32 = arith.constant 1 : i32
    %1 = arith.addi %0, %c1_i32 : i32
    %c0_i32 = arith.constant 0 : i32
    %c0_i32_0 = arith.constant 0 : i32
    %c0_i32_1 = arith.constant 0 : i32
    %c0_i32_2 = arith.constant 0 : i32
    return %c0_i32, %1, %c0_i32_0, %c0_i32_1 : i32, i32, i32, i32
  }
  func.func @transform_5(%arg0: i32) -> (i32, i32, i32, i32) {
    %c2_i32 = arith.constant 2 : i32
    %0 = arith.muli %c2_i32, %arg0 : i32
    %c2_i32_0 = arith.constant 2 : i32
    %1 = arith.addi %0, %c2_i32_0 : i32
    %c0_i32 = arith.constant 0 : i32
    %c0_i32_1 = arith.constant 0 : i32
    %c0_i32_2 = arith.constant 0 : i32
    %c0_i32_3 = arith.constant 0 : i32
    return %c0_i32, %1, %c0_i32_1, %c0_i32_2 : i32, i32, i32, i32
  }
  func.func @transform_6(%arg0: i32) -> (i32, i32, i32) {
    %c0_i32 = arith.constant 0 : i32
    %c0_i32_0 = arith.constant 0 : i32
    %c0_i32_1 = arith.constant 0 : i32
    %c0_i32_2 = arith.constant 0 : i32
    return %c0_i32, %c0_i32_0, %c0_i32_1 : i32, i32, i32
  }
  func.func @transform_7(%arg0: i32) -> (i32, i32) {
    %c0_i32 = arith.constant 0 : i32
    %c0_i32_0 = arith.constant 0 : i32
    %c0_i32_1 = arith.constant 0 : i32
    return %c0_i32, %c0_i32_0 : i32, i32
  }
  func.func @transform_8(%arg0: i32) -> (i32, i32, i32, i32) {
    %c0_i32 = arith.constant 0 : i32
    %c0_i32_0 = arith.constant 0 : i32
    %c0_i32_1 = arith.constant 0 : i32
    %c0_i32_2 = arith.constant 0 : i32
    return %c0_i32, %arg0, %c0_i32_0, %c0_i32_1 : i32, i32, i32, i32
  }
}

</mosaic_0001>

<llo_original>
// kernel: downsample.1
$region0: #{downsample.1}
  #allocation0 [shape = 'u32[]', space=smem, size = 0x4, offset = 0x4, fixed_abs, tag = 'smem constant byte address 0x4 - core index']
  #allocation1 [shape = 'u32[72,128]{1,0:T(1,128)}', space=vmem, size = 0x9000, scoped, tag = 'internal scratch']
  %s0 = inlined_call_operand.vmem [shape: bf16[2,18,9,4], index: 0, kind: input, shape index: {}, may-alias: {0,1,2}]
  %s1 = inlined_call_operand.vmem [shape: bf16[2,18,9,4], index: 1, kind: input, shape index: {}, may-alias: {0,1,2}]
  %s2 = inlined_call_operand.vmem [shape: bf16[2,18,9,4], index: 2, kind: input, shape index: {}, may-alias: {0,1,2}]
  %s3 = inlined_call_operand.vmem [shape: bf16[2,18,9,4], index: 3, kind: input, shape index: {}, may-alias: {3,4,5}]
  %s4 = inlined_call_operand.vmem [shape: bf16[2,18,9,4], index: 4, kind: input, shape index: {}, may-alias: {3,4,5}]
  %s5 = inlined_call_operand.vmem [shape: bf16[2,18,9,4], index: 5, kind: input, shape index: {}, may-alias: {3,4,5}]
  %s6 = inlined_call_operand.vmem [shape: bf16[9,4,128], index: 6, kind: input, shape index: {}]
  %s7 = inlined_call_operand.vmem [shape: f32[1,128], index: 7, kind: input, shape index: {}]
  %s8 = inlined_call_operand.vmem [shape: f32[2,8,8,128], index: 8, kind: output, shape index: {}]
  %s9 = sld [smem:[#allocation0]]
  $region345: #{downsample.1} parent=0
    _
  %s11 = ssub.s32 1, %s9
  %s12 = scalar_select 0, %s11, %s9
  $region1: #{downsample.1} parent=0
    #allocation2 [shape = 'u8[16384]{0}', space=vmem, size = 0x4000, scoped, tag = 'input window, operand 0']
    #allocation3 [shape = 'u8[16384]{0}', space=vmem, size = 0x4000, scoped, tag = 'input window, operand 1']
    #allocation4 [shape = 'u8[16384]{0}', space=vmem, size = 0x4000, scoped, tag = 'input window, operand 2']
    #allocation5 [shape = 'u8[16384]{0}', space=vmem, size = 0x4000, scoped, tag = 'input window, operand 3']
    #allocation6 [shape = 'u8[16384]{0}', space=vmem, size = 0x4000, scoped, tag = 'input window, operand 4']
    #allocation7 [shape = 'u8[16384]{0}', space=vmem, size = 0x4000, scoped, tag = 'input window, operand 5']
    #allocation8 [shape = 'u8[16384]{0}', space=vmem, size = 0x4000, scoped, tag = 'output window, operand 0']
    loop: start=0, step=1, limit=10
    $region2: #{downsample.1} parent=1 // loop_pre_header
      _
    $region3: #{downsample.1} parent=1 // loop_header
      %s14 = sphi 0, %s18
      %p15 = scmp.ge.s32.totalorder %s14, 10
      %s26 = sphi 0, %s28
      %s29 = sphi 0, %s26
      %s30 = sphi 0, %s29
      %s46 = sphi 0, %s30
      %s56 = sphi 0, %s58
      %s59 = sphi 0, %s56
      %s60 = sphi 0, %s59
      %s76 = sphi 0, %s60
      %s86 = sphi 0, %s88
      %s89 = sphi 0, %s86
      %s90 = sphi 0, %s89
      %s106 = sphi 0, %s90
      %s114 = sphi 0, %s116
      %s117 = sphi 0, %s114
      %s118 = sphi 0, %s117
      %s134 = sphi 0, %s118
      %s144 = sphi 0, %s146
      %s147 = sphi 0, %s144
      %s148 = sphi 0, %s147
      %s164 = sphi 0, %s148
      %s174 = sphi 0, %s176
      %s177 = sphi 0, %s174
      %s178 = sphi 0, %s177
      %s194 = sphi 0, %s178
      %s198 = sphi 0, %s198
      %s200 = sphi 0, %s198
      %s201 = sphi 0, %s200
      %s215 = sphi 0, %s201
      %s219 = sphi 0, %s219
      %s221 = sphi 0, %s219
      %s222 = sphi 0, %s221
      %s236 = sphi 0, %s222
      %s242 = sphi 0, %s244
      %s245 = sphi 0, %s242
      %s246 = sphi 0, %s245
      %s262 = sphi 0, %s246
    $region4: #{downsample.1} parent=1 // loop_header_branch
      %17 = sbr.rel (%p15) target = $region8
    $region5: #{downsample.1} parent=1 // loop_body
      %s19 = ssub.s32 %s14, 1
      %s20 = ssub.s32 %s14, 2
      %s21 = sadd.s32 %s14, 1
      %s22 = smul.u32 %s14, 2
      %s23 = smul.u32 %s21, 2
      %s24 = ssub.s32 %s22, %s23
      %p25 = scmp.eq.s32.totalorder %s24, 0
      %s27 = sadd.s32 %s26, 1
      %s28 = scalar_select %p25, %s26, %s27
      %p31 = pneg %p25
      %p32 = scmp.eq.s32.totalorder %s14, 7
      %p33 = por %p31, %p32
      %p34 = scmp.ne.s32.totalorder %s26, %s29
      %p35 = scmp.eq.s32.totalorder %s14, 0
      %p36 = por %p34, %p35
      %p37 = scmp.ne.s32.totalorder %s26, %s29
      %p38 = scmp.eq.s32.totalorder %s19, 7
      %p39 = por %p37, %p38
      %p40 = scmp.ne.s32.totalorder %s29, %s30
      %p41 = scmp.eq.s32.totalorder %s19, 0
      %p42 = por %p40, %p41
      %p43 = scmp.ne.s32.totalorder %s29, %s30
      %p44 = scmp.eq.s32.totalorder %s20, 7
      %p45 = por %p43, %p44
      %p47 = scmp.ne.s32.totalorder %s30, %s46
      %p48 = scmp.eq.s32.totalorder %s20, 0
      %p49 = por %p47, %p48
      %s50 = smul.u32 %s14, 2
      %s51 = sadd.s32 %s50, 1
      %s52 = smul.u32 %s21, 2
      %s53 = sadd.s32 %s52, 1
      %s54 = ssub.s32 %s51, %s53
      %p55 = scmp.eq.s32.totalorder %s54, 0
      %s57 = sadd.s32 %s56, 1
      %s58 = scalar_select %p55, %s56, %s57
      %p61 = pneg %p55
      %p62 = scmp.eq.s32.totalorder %s14, 7
      %p63 = por %p61, %p62
      %p64 = scmp.ne.s32.totalorder %s56, %s59
      %p65 = scmp.eq.s32.totalorder %s14, 0
      %p66 = por %p64, %p65
      %p67 = scmp.ne.s32.totalorder %s56, %s59
      %p68 = scmp.eq.s32.totalorder %s19, 7
      %p69 = por %p67, %p68
      %p70 = scmp.ne.s32.totalorder %s59, %s60
      %p71 = scmp.eq.s32.totalorder %s19, 0
      %p72 = por %p70, %p71
      %p73 = scmp.ne.s32.totalorder %s59, %s60
      %p74 = scmp.eq.s32.totalorder %s20, 7
      %p75 = por %p73, %p74
      %p77 = scmp.ne.s32.totalorder %s60, %s76
      %p78 = scmp.eq.s32.totalorder %s20, 0
      %p79 = por %p77, %p78
      %s80 = smul.u32 %s14, 2
      %s81 = sadd.s32 %s80, 2
      %s82 = smul.u32 %s21, 2
      %s83 = sadd.s32 %s82, 2
      %s84 = ssub.s32 %s81, %s83
      %p85 = scmp.eq.s32.totalorder %s84, 0
      %s87 = sadd.s32 %s86, 1
      %s88 = scalar_select %p85, %s86, %s87
      %p91 = pneg %p85
      %p92 = scmp.eq.s32.totalorder %s14, 7
      %p93 = por %p91, %p92
      %p94 = scmp.ne.s32.totalorder %s86, %s89
      %p95 = scmp.eq.s32.totalorder %s14, 0
      %p96 = por %p94, %p95
      %p97 = scmp.ne.s32.totalorder %s86, %s89
      %p98 = scmp.eq.s32.totalorder %s19, 7
      %p99 = por %p97, %p98
      %p100 = scmp.ne.s32.totalorder %s89, %s90
      %p101 = scmp.eq.s32.totalorder %s19, 0
      %p102 = por %p100, %p101
      %p103 = scmp.ne.s32.totalorder %s89, %s90
      %p104 = scmp.eq.s32.totalorder %s20, 7
      %p105 = por %p103, %p104
      %p107 = scmp.ne.s32.totalorder %s90, %s106
      %p108 = scmp.eq.s32.totalorder %s20, 0
      %p109 = por %p107, %p108
      %s110 = smul.u32 %s14, 2
      %s111 = smul.u32 %s21, 2
      %s112 = ssub.s32 %s110, %s111
      %p113 = scmp.eq.s32.totalorder %s112, 0
      %s115 = sadd.s32 %s114, 1
      %s116 = scalar_select %p113, %s114, %s115
      %p119 = pneg %p113
      %p120 = scmp.eq.s32.totalorder %s14, 7
      %p121 = por %p119, %p120
      %p122 = scmp.ne.s32.totalorder %s114, %s117
      %p123 = scmp.eq.s32.totalorder %s14, 0
      %p124 = por %p122, %p123
      %p125 = scmp.ne.s32.totalorder %s114, %s117
      %p126 = scmp.eq.s32.totalorder %s19, 7
      %p127 = por %p125, %p126
      %p128 = scmp.ne.s32.totalorder %s117, %s118
      %p129 = scmp.eq.s32.totalorder %s19, 0
      %p130 = por %p128, %p129
      %p131 = scmp.ne.s32.totalorder %s117, %s118
      %p132 = scmp.eq.s32.totalorder %s20, 7
      %p133 = por %p131, %p132
      %p135 = scmp.ne.s32.totalorder %s118, %s134
      %p136 = scmp.eq.s32.totalorder %s20, 0
      %p137 = por %p135, %p136
      %s138 = smul.u32 %s14, 2
      %s139 = sadd.s32 %s138, 1
      %s140 = smul.u32 %s21, 2
      %s141 = sadd.s32 %s140, 1
      %s142 = ssub.s32 %s139, %s141
      %p143 = scmp.eq.s32.totalorder %s142, 0
      %s145 = sadd.s32 %s144, 1
      %s146 = scalar_select %p143, %s144, %s145
      %p149 = pneg %p143
      %p150 = scmp.eq.s32.totalorder %s14, 7
      %p151 = por %p149, %p150
      %p152 = scmp.ne.s32.totalorder %s144, %s147
      %p153 = scmp.eq.s32.totalorder %s14, 0
      %p154 = por %p152, %p153
      %p155 = scmp.ne.s32.totalorder %s144, %s147
      %p156 = scmp.eq.s32.totalorder %s19, 7
      %p157 = por %p155, %p156
      %p158 = scmp.ne.s32.totalorder %s147, %s148
      %p159 = scmp.eq.s32.totalorder %s19, 0
      %p160 = por %p158, %p159
      %p161 = scmp.ne.s32.totalorder %s147, %s148
      %p162 = scmp.eq.s32.totalorder %s20, 7
      %p163 = por %p161, %p162
      %p165 = scmp.ne.s32.totalorder %s148, %s164
      %p166 = scmp.eq.s32.totalorder %s20, 0
      %p167 = por %p165, %p166
      %s168 = smul.u32 %s14, 2
      %s169 = sadd.s32 %s168, 2
      %s170 = smul.u32 %s21, 2
      %s171 = sadd.s32 %s170, 2
      %s172 = ssub.s32 %s169, %s171
      %p173 = scmp.eq.s32.totalorder %s172, 0
      %s175 = sadd.s32 %s174, 1
      %s176 = scalar_select %p173, %s174, %s175
      %p179 = pneg %p173
      %p180 = scmp.eq.s32.totalorder %s14, 7
      %p181 = por %p179, %p180
      %p182 = scmp.ne.s32.totalorder %s174, %s177
      %p183 = scmp.eq.s32.totalorder %s14, 0
      %p184 = por %p182, %p183
      %p185 = scmp.ne.s32.totalorder %s174, %s177
      %p186 = scmp.eq.s32.totalorder %s19, 7
      %p187 = por %p185, %p186
      %p188 = scmp.ne.s32.totalorder %s177, %s178
      %p189 = scmp.eq.s32.totalorder %s19, 0
      %p190 = por %p188, %p189
      %p191 = scmp.ne.s32.totalorder %s177, %s178
      %p192 = scmp.eq.s32.totalorder %s20, 7
      %p193 = por %p191, %p192
      %p195 = scmp.ne.s32.totalorder %s178, %s194
      %p196 = scmp.eq.s32.totalorder %s20, 0
      %p197 = por %p195, %p196
      %s199 = sadd.s32 %s198, 1
      %p202 = scmp.eq.s32.totalorder %s14, 7
      %p203 = scmp.ne.s32.totalorder %s198, %s200
      %p204 = scmp.eq.s32.totalorder %s14, 0
      %p205 = por %p203, %p204
      %p206 = scmp.ne.s32.totalorder %s198, %s200
      %p207 = scmp.eq.s32.totalorder %s19, 7
      %p208 = por %p206, %p207
      %p209 = scmp.ne.s32.totalorder %s200, %s201
      %p210 = scmp.eq.s32.totalorder %s19, 0
      %p211 = por %p209, %p210
      %p212 = scmp.ne.s32.totalorder %s200, %s201
      %p213 = scmp.eq.s32.totalorder %s20, 7
      %p214 = por %p212, %p213
      %p216 = scmp.ne.s32.totalorder %s201, %s215
      %p217 = scmp.eq.s32.totalorder %s20, 0
      %p218 = por %p216, %p217
      %s220 = sadd.s32 %s219, 1
      %p223 = scmp.eq.s32.totalorder %s14, 7
      %p224 = scmp.ne.s32.totalorder %s219, %s221
      %p225 = scmp.eq.s32.totalorder %s14, 0
      %p226 = por %p224, %p225
      %p227 = scmp.ne.s32.totalorder %s219, %s221
      %p228 = scmp.eq.s32.totalorder %s19, 7
      %p229 = por %p227, %p228
      %p230 = scmp.ne.s32.totalorder %s221, %s222
      %p231 = scmp.eq.s32.totalorder %s19, 0
      %p232 = por %p230, %p231
      %p233 = scmp.ne.s32.totalorder %s221, %s222
      %p234 = scmp.eq.s32.totalorder %s20, 7
      %p235 = por %p233, %p234
      %p237 = scmp.ne.s32.totalorder %s222, %s236
      %p238 = scmp.eq.s32.totalorder %s20, 0
      %p239 = por %p237, %p238
      %s240 = ssub.s32 %s14, %s21
      %p241 = scmp.eq.s32.totalorder %s240, 0
      %s243 = sadd.s32 %s242, 1
      %s244 = scalar_select %p241, %s242, %s243
      %p247 = pneg %p241
      %p248 = scmp.eq.s32.totalorder %s14, 7
      %p249 = por %p247, %p248
      %p250 = scmp.ne.s32.totalorder %s242, %s245
      %p251 = scmp.eq.s32.totalorder %s14, 0
      %p252 = por %p250, %p251
      %p253 = scmp.ne.s32.totalorder %s242, %s245
      %p254 = scmp.eq.s32.totalorder %s19, 7
      %p255 = por %p253, %p254
      %p256 = scmp.ne.s32.totalorder %s245, %s246
      %p257 = scmp.eq.s32.totalorder %s19, 0
      %p258 = por %p256, %p257
      %p259 = scmp.ne.s32.totalorder %s245, %s246
      %p260 = scmp.eq.s32.totalorder %s20, 7
      %p261 = por %p259, %p260
      %p263 = scmp.ne.s32.totalorder %s246, %s262
      %p264 = scmp.eq.s32.totalorder %s20, 0
      %p265 = por %p263, %p264
      %p266 = scmp.le.s32.totalorder 1, %s14
      %p267 = scmp.lt.s32.totalorder %s14, 9
      %p268 = pnand %p266, %p267
      %p269 = pneg %p268
      // Predicated region
      $region9: #{downsample.1} parent=5 // pred_check
        _
      $region10: #{downsample.1} parent=5 // pred_check_branch
        %271 = sbr.rel (%p268) target = $region12
      $region11: #{downsample.1} parent=5 // pred_region
        %s272 = ssub.s32 %s14, 1
        // Predicated region
        $region13: #{downsample.1} parent=11 // pred_check
          %p273 = pneg %p211
        $region14: #{downsample.1} parent=11 // pred_check_branch
          %275 = sbr.rel (%p273) target = $region16
        $region15: #{downsample.1} parent=11 // pred_region
          _
        $region16: #{downsample.1} parent=11 // pred_fallthru
          _
        // Predicated region
        $region17: #{downsample.1} parent=11 // pred_check
          %p276 = pneg %p232
        $region18: #{downsample.1} parent=11 // pred_check_branch
          %278 = sbr.rel (%p276) target = $region20
        $region19: #{downsample.1} parent=11 // pred_region
          _
        $region20: #{downsample.1} parent=11 // pred_fallthru
          _
      $region12: #{downsample.1} parent=5 // pred_fallthru
        _
      %p279 = scmp.lt.s32.totalorder %s14, 8
      // Predicated region
      $region21: #{downsample.1} parent=5 // pred_check
        %p280 = pneg %p279
      $region22: #{downsample.1} parent=5 // pred_check_branch
        %282 = sbr.rel (%p280) target = $region24
      $region23: #{downsample.1} parent=5 // pred_region
        // Predicated region
        $region25: #{downsample.1} parent=23 // pred_check
          %p283 = pneg %p36
        $region26: #{downsample.1} parent=23 // pred_check_branch
          %285 = sbr.rel (%p283) target = $region28
        $region27: #{downsample.1} parent=23 // pred_region
          %s286 = sand.u32 %s26, 1
          %s287 = sand.u32 %s26, 1
          %s288 = smul.addr %s287, 16
          %s289 = scalar_lea.vmem [#allocation2], %s288
          %s290 = smul.u32 %s14, 2
          %s291 = smul.addr %s290, 2
          %s292 = smul.addr %s291, 4
          %s293 = scalar_lea.vmem %s0, %s292
          // Predicated region
          $region29: #{downsample.1} parent=27 // pred_check
            _
          $region30: #{downsample.1} parent=27 // pred_check_branch
            %295 = sbr.rel (0) target = $region32
          $region31: #{downsample.1} parent=27 // pred_region
            // Predicated region
            $region33: #{downsample.1} parent=31 // pred_check
              _
            $region34: #{downsample.1} parent=31 // pred_check_branch
              %297 = sbr.rel target = $region36
            $region35: #{downsample.1} parent=31 // pred_region
              // Predicated region
              $region48: #{downsample.1} parent=35 // pred_check
                _
              $region49: #{downsample.1} parent=35 // pred_check_branch
                %319 = sbr.rel (0) target = $region51
              $region50: #{downsample.1} parent=35 // pred_region
                loop: start=0, step=1, limit=1
                $region52: #{downsample.1} parent=50 // loop_pre_header
                  _
                $region53: #{downsample.1} parent=50 // loop_header
                  %s321 = sphi 0, %s325
                  %p322 = scmp.ge.s32.totalorder %s321, 1
                  %s326 = sphi %s293, %s293
                  %s327 = sphi %s289, %s289
                $region54: #{downsample.1} parent=50 // loop_header_branch
                  %324 = sbr.rel (%p322) target = $region58
                $region55: #{downsample.1} parent=50 // loop_body
                  _
                $region56: #{downsample.1} parent=50 // loop_footer
                  %s325 = sadd.s32 1, %s321
                $region57: #{downsample.1} parent=50 // loop_footer_branch
                  %320 = sbr.rel target = $region53
                $region58: #{downsample.1} parent=50 // loop_exit
                  _
                %s329 = ssub.s32 16, 1
                loop: start=0, step=1, limit=1
                $region59: #{downsample.1} parent=50 // loop_pre_header
                  _
                $region60: #{downsample.1} parent=50 // loop_header
                  %s331 = sphi 0, %s335
                  %p332 = scmp.ge.s32.totalorder %s331, 1
                  %s336 = sphi %s293, %s293
                  %s337 = sphi %s289, %s289
                $region61: #{downsample.1} parent=50 // loop_header_branch
                  %334 = sbr.rel (%p332) target = $region65
                $region62: #{downsample.1} parent=50 // loop_body
                  %v338 = vld [vmem:[%s336] sm:%s329]
                  %339 = vst [vmem:[%s337] sm:%s329] %v338
                  %v340 = vld [vmem:[%s336 + $0x4] sm:%s329]
                  %341 = vst [vmem:[%s337 + $0x4] sm:%s329] %v340
                  %v342 = vld [vmem:[%s336 + $0x90] sm:%s329]
                  %343 = vst [vmem:[%s337 + $0x8] sm:%s329] %v342
                  %v344 = vld [vmem:[%s336 + $0x94] sm:%s329]
                  %345 = vst [vmem:[%s337 + $0xc] sm:%s329] %v344
                $region63: #{downsample.1} parent=50 // loop_footer
                  %s335 = sadd.s32 1, %s331
                $region64: #{downsample.1} parent=50 // loop_footer_branch
                  %330 = sbr.rel target = $region60
                $region65: #{downsample.1} parent=50 // loop_exit
                  _
              $region51: #{downsample.1} parent=35 // pred_fallthru
                _
            $region36: #{downsample.1} parent=31 // pred_fallthru
              _
            // Predicated region
            $region37: #{downsample.1} parent=31 // pred_check
              _
            $region38: #{downsample.1} parent=31 // pred_check_branch
              %299 = sbr.rel (0) target = $region40
            $region39: #{downsample.1} parent=31 // pred_region
              %s301 = ssub.s32 16, 1
              loop: start=0, step=1, limit=1
              $region41: #{downsample.1} parent=39 // loop_pre_header
                _
              $region42: #{downsample.1} parent=39 // loop_header
                %s303 = sphi 0, %s307
                %p304 = scmp.ge.s32.totalorder %s303, 1
                %s308 = sphi %s293, %s293
                %s309 = sphi %s289, %s289
              $region43: #{downsample.1} parent=39 // loop_header_branch
                %306 = sbr.rel (%p304) target = $region47
              $region44: #{downsample.1} parent=39 // loop_body
                %v310 = vld [vmem:[%s308] sm:%s301]
                %311 = vst [vmem:[%s309] sm:%s301] %v310
                %v312 = vld [vmem:[%s308 + $0x4] sm:%s301]
                %313 = vst [vmem:[%s309 + $0x4] sm:%s301] %v312
                %v314 = vld [vmem:[%s308 + $0x90] sm:%s301]
                %315 = vst [vmem:[%s309 + $0x8] sm:%s301] %v314
                %v316 = vld [vmem:[%s308 + $0x94] sm:%s301]
                %317 = vst [vmem:[%s309 + $0xc] sm:%s301] %v316
              $region45: #{downsample.1} parent=39 // loop_footer
                %s307 = sadd.s32 1, %s303
              $region46: #{downsample.1} parent=39 // loop_footer_branch
                %302 = sbr.rel target = $region42
              $region47: #{downsample.1} parent=39 // loop_exit
                _
            $region40: #{downsample.1} parent=31 // pred_fallthru
              _
          $region32: #{downsample.1} parent=27 // pred_fallthru
            _
          %346 = vnop
        $region28: #{downsample.1} parent=23 // pred_fallthru
          _
        // Predicated region
        $region66: #{downsample.1} parent=23 // pred_check
          %p347 = pneg %p66
        $region67: #{downsample.1} parent=23 // pred_check_branch
          %349 = sbr.rel (%p347) target = $region69
        $region68: #{downsample.1} parent=23 // pred_region
          %s350 = sand.u32 %s56, 1
          %s351 = sand.u32 %s56, 1
          %s352 = smul.addr %s351, 16
          %s353 = scalar_lea.vmem [#allocation3], %s352
          %s354 = smul.u32 %s14, 2
          %s355 = sadd.s32 %s354, 1
          %s356 = smul.addr %s355, 2
          %s357 = smul.addr %s356, 4
          %s358 = scalar_lea.vmem %s1, %s357
          // Predicated region
          $region70: #{downsample.1} parent=68 // pred_check
            _
          $region71: #{downsample.1} parent=68 // pred_check_branch
            %360 = sbr.rel (0) target = $region73
          $region72: #{downsample.1} parent=68 // pred_region
            // Predicated region
            $region74: #{downsample.1} parent=72 // pred_check
              _
            $region75: #{downsample.1} parent=72 // pred_check_branch
              %362 = sbr.rel target = $region77
            $region76: #{downsample.1} parent=72 // pred_region
              // Predicated region
              $region89: #{downsample.1} parent=76 // pred_check
                _
              $region90: #{downsample.1} parent=76 // pred_check_branch
                %384 = sbr.rel (0) target = $region92
              $region91: #{downsample.1} parent=76 // pred_region
                loop: start=0, step=1, limit=1
                $region93: #{downsample.1} parent=91 // loop_pre_header
                  _
                $region94: #{downsample.1} parent=91 // loop_header
                  %s386 = sphi 0, %s390
                  %p387 = scmp.ge.s32.totalorder %s386, 1
                  %s391 = sphi %s358, %s358
                  %s392 = sphi %s353, %s353
                $region95: #{downsample.1} parent=91 // loop_header_branch
                  %389 = sbr.rel (%p387) target = $region99
                $region96: #{downsample.1} parent=91 // loop_body
                  _
                $region97: #{downsample.1} parent=91 // loop_footer
                  %s390 = sadd.s32 1, %s386
                $region98: #{downsample.1} parent=91 // loop_footer_branch
                  %385 = sbr.rel target = $region94
                $region99: #{downsample.1} parent=91 // loop_exit
                  _
                %s394 = ssub.s32 16, 1
                loop: start=0, step=1, limit=1
                $region100: #{downsample.1} parent=91 // loop_pre_header
                  _
                $region101: #{downsample.1} parent=91 // loop_header
                  %s396 = sphi 0, %s400
                  %p397 = scmp.ge.s32.totalorder %s396, 1
                  %s401 = sphi %s358, %s358
                  %s402 = sphi %s353, %s353
                $region102: #{downsample.1} parent=91 // loop_header_branch
                  %399 = sbr.rel (%p397) target = $region106
                $region103: #{downsample.1} parent=91 // loop_body
                  %v403 = vld [vmem:[%s401] sm:%s394]
                  %404 = vst [vmem:[%s402] sm:%s394] %v403
                  %v405 = vld [vmem:[%s401 + $0x4] sm:%s394]
                  %406 = vst [vmem:[%s402 + $0x4] sm:%s394] %v405
                  %v407 = vld [vmem:[%s401 + $0x90] sm:%s394]
                  %408 = vst [vmem:[%s402 + $0x8] sm:%s394] %v407
                  %v409 = vld [vmem:[%s401 + $0x94] sm:%s394]
                  %410 = vst [vmem:[%s402 + $0xc] sm:%s394] %v409
                $region104: #{downsample.1} parent=91 // loop_footer
                  %s400 = sadd.s32 1, %s396
                $region105: #{downsample.1} parent=91 // loop_footer_branch
                  %395 = sbr.rel target = $region101
                $region106: #{downsample.1} parent=91 // loop_exit
                  _
              $region92: #{downsample.1} parent=76 // pred_fallthru
                _
            $region77: #{downsample.1} parent=72 // pred_fallthru
              _
            // Predicated region
            $region78: #{downsample.1} parent=72 // pred_check
              _
            $region79: #{downsample.1} parent=72 // pred_check_branch
              %364 = sbr.rel (0) target = $region81
            $region80: #{downsample.1} parent=72 // pred_region
              %s366 = ssub.s32 16, 1
              loop: start=0, step=1, limit=1
              $region82: #{downsample.1} parent=80 // loop_pre_header
                _
              $region83: #{downsample.1} parent=80 // loop_header
                %s368 = sphi 0, %s372
                %p369 = scmp.ge.s32.totalorder %s368, 1
                %s373 = sphi %s358, %s358
                %s374 = sphi %s353, %s353
              $region84: #{downsample.1} parent=80 // loop_header_branch
                %371 = sbr.rel (%p369) target = $region88
              $region85: #{downsample.1} parent=80 // loop_body
                %v375 = vld [vmem:[%s373] sm:%s366]
                %376 = vst [vmem:[%s374] sm:%s366] %v375
                %v377 = vld [vmem:[%s373 + $0x4] sm:%s366]
                %378 = vst [vmem:[%s374 + $0x4] sm:%s366] %v377
                %v379 = vld [vmem:[%s373 + $0x90] sm:%s366]
                %380 = vst [vmem:[%s374 + $0x8] sm:%s366] %v379
                %v381 = vld [vmem:[%s373 + $0x94] sm:%s366]
                %382 = vst [vmem:[%s374 + $0xc] sm:%s366] %v381
              $region86: #{downsample.1} parent=80 // loop_footer
                %s372 = sadd.s32 1, %s368
              $region87: #{downsample.1} parent=80 // loop_footer_branch
                %367 = sbr.rel target = $region83
              $region88: #{downsample.1} parent=80 // loop_exit
                _
            $region81: #{downsample.1} parent=72 // pred_fallthru
              _
          $region73: #{downsample.1} parent=68 // pred_fallthru
            _
          %411 = vnop
        $region69: #{downsample.1} parent=23 // pred_fallthru
          _
        // Predicated region
        $region107: #{downsample.1} parent=23 // pred_check
          %p412 = pneg %p96
        $region108: #{downsample.1} parent=23 // pred_check_branch
          %414 = sbr.rel (%p412) target = $region110
        $region109: #{downsample.1} parent=23 // pred_region
          %s415 = sand.u32 %s86, 1
          %s416 = sand.u32 %s86, 1
          %s417 = smul.addr %s416, 16
          %s418 = scalar_lea.vmem [#allocation4], %s417
          %s419 = smul.u32 %s14, 2
          %s420 = sadd.s32 %s419, 2
          %s421 = smul.addr %s420, 2
          %s422 = smul.addr %s421, 4
          %s423 = scalar_lea.vmem %s2, %s422
          // Predicated region
          $region111: #{downsample.1} parent=109 // pred_check
            _
          $region112: #{downsample.1} parent=109 // pred_check_branch
            %425 = sbr.rel (0) target = $region114
          $region113: #{downsample.1} parent=109 // pred_region
            // Predicated region
            $region115: #{downsample.1} parent=113 // pred_check
              _
            $region116: #{downsample.1} parent=113 // pred_check_branch
              %427 = sbr.rel target = $region118
            $region117: #{downsample.1} parent=113 // pred_region
              // Predicated region
              $region130: #{downsample.1} parent=117 // pred_check
                _
              $region131: #{downsample.1} parent=117 // pred_check_branch
                %449 = sbr.rel (0) target = $region133
              $region132: #{downsample.1} parent=117 // pred_region
                loop: start=0, step=1, limit=1
                $region134: #{downsample.1} parent=132 // loop_pre_header
                  _
                $region135: #{downsample.1} parent=132 // loop_header
                  %s451 = sphi 0, %s455
                  %p452 = scmp.ge.s32.totalorder %s451, 1
                  %s456 = sphi %s423, %s423
                  %s457 = sphi %s418, %s418
                $region136: #{downsample.1} parent=132 // loop_header_branch
                  %454 = sbr.rel (%p452) target = $region140
                $region137: #{downsample.1} parent=132 // loop_body
                  _
                $region138: #{downsample.1} parent=132 // loop_footer
                  %s455 = sadd.s32 1, %s451
                $region139: #{downsample.1} parent=132 // loop_footer_branch
                  %450 = sbr.rel target = $region135
                $region140: #{downsample.1} parent=132 // loop_exit
                  _
                %s459 = ssub.s32 16, 1
                loop: start=0, step=1, limit=1
                $region141: #{downsample.1} parent=132 // loop_pre_header
                  _
                $region142: #{downsample.1} parent=132 // loop_header
                  %s461 = sphi 0, %s465
                  %p462 = scmp.ge.s32.totalorder %s461, 1
                  %s466 = sphi %s423, %s423
                  %s467 = sphi %s418, %s418
                $region143: #{downsample.1} parent=132 // loop_header_branch
                  %464 = sbr.rel (%p462) target = $region147
                $region144: #{downsample.1} parent=132 // loop_body
                  %v468 = vld [vmem:[%s466] sm:%s459]
                  %469 = vst [vmem:[%s467] sm:%s459] %v468
                  %v470 = vld [vmem:[%s466 + $0x4] sm:%s459]
                  %471 = vst [vmem:[%s467 + $0x4] sm:%s459] %v470
                  %v472 = vld [vmem:[%s466 + $0x90] sm:%s459]
                  %473 = vst [vmem:[%s467 + $0x8] sm:%s459] %v472
                  %v474 = vld [vmem:[%s466 + $0x94] sm:%s459]
                  %475 = vst [vmem:[%s467 + $0xc] sm:%s459] %v474
                $region145: #{downsample.1} parent=132 // loop_footer
                  %s465 = sadd.s32 1, %s461
                $region146: #{downsample.1} parent=132 // loop_footer_branch
                  %460 = sbr.rel target = $region142
                $region147: #{downsample.1} parent=132 // loop_exit
                  _
              $region133: #{downsample.1} parent=117 // pred_fallthru
                _
            $region118: #{downsample.1} parent=113 // pred_fallthru
              _
            // Predicated region
            $region119: #{downsample.1} parent=113 // pred_check
              _
            $region120: #{downsample.1} parent=113 // pred_check_branch
              %429 = sbr.rel (0) target = $region122
            $region121: #{downsample.1} parent=113 // pred_region
              %s431 = ssub.s32 16, 1
              loop: start=0, step=1, limit=1
              $region123: #{downsample.1} parent=121 // loop_pre_header
                _
              $region124: #{downsample.1} parent=121 // loop_header
                %s433 = sphi 0, %s437
                %p434 = scmp.ge.s32.totalorder %s433, 1
                %s438 = sphi %s423, %s423
                %s439 = sphi %s418, %s418
              $region125: #{downsample.1} parent=121 // loop_header_branch
                %436 = sbr.rel (%p434) target = $region129
              $region126: #{downsample.1} parent=121 // loop_body
                %v440 = vld [vmem:[%s438] sm:%s431]
                %441 = vst [vmem:[%s439] sm:%s431] %v440
                %v442 = vld [vmem:[%s438 + $0x4] sm:%s431]
                %443 = vst [vmem:[%s439 + $0x4] sm:%s431] %v442
                %v444 = vld [vmem:[%s438 + $0x90] sm:%s431]
                %445 = vst [vmem:[%s439 + $0x8] sm:%s431] %v444
                %v446 = vld [vmem:[%s438 + $0x94] sm:%s431]
                %447 = vst [vmem:[%s439 + $0xc] sm:%s431] %v446
              $region127: #{downsample.1} parent=121 // loop_footer
                %s437 = sadd.s32 1, %s433
              $region128: #{downsample.1} parent=121 // loop_footer_branch
                %432 = sbr.rel target = $region124
              $region129: #{downsample.1} parent=121 // loop_exit
                _
            $region122: #{downsample.1} parent=113 // pred_fallthru
              _
          $region114: #{downsample.1} parent=109 // pred_fallthru
            _
          %476 = vnop
        $region110: #{downsample.1} parent=23 // pred_fallthru
          _
        // Predicated region
        $region148: #{downsample.1} parent=23 // pred_check
          %p477 = pneg %p124
        $region149: #{downsample.1} parent=23 // pred_check_branch
          %479 = sbr.rel (%p477) target = $region151
        $region150: #{downsample.1} parent=23 // pred_region
          %s480 = sand.u32 %s114, 1
          %s481 = sand.u32 %s114, 1
          %s482 = smul.addr %s481, 16
          %s483 = scalar_lea.vmem [#allocation5], %s482
          %s484 = smul.u32 %s14, 2
          %s485 = smul.addr %s484, 2
          %s486 = smul.addr %s485, 4
          %s487 = scalar_lea.vmem %s3, %s486
          // Predicated region
          $region152: #{downsample.1} parent=150 // pred_check
            _
          $region153: #{downsample.1} parent=150 // pred_check_branch
            %489 = sbr.rel (0) target = $region155
          $region154: #{downsample.1} parent=150 // pred_region
            // Predicated region
            $region156: #{downsample.1} parent=154 // pred_check
              _
            $region157: #{downsample.1} parent=154 // pred_check_branch
              %491 = sbr.rel target = $region159
            $region158: #{downsample.1} parent=154 // pred_region
              // Predicated region
              $region171: #{downsample.1} parent=158 // pred_check
                _
              $region172: #{downsample.1} parent=158 // pred_check_branch
                %513 = sbr.rel (0) target = $region174
              $region173: #{downsample.1} parent=158 // pred_region
                loop: start=0, step=1, limit=1
                $region175: #{downsample.1} parent=173 // loop_pre_header
                  _
                $region176: #{downsample.1} parent=173 // loop_header
                  %s515 = sphi 0, %s519
                  %p516 = scmp.ge.s32.totalorder %s515, 1
                  %s520 = sphi %s487, %s487
                  %s521 = sphi %s483, %s483
                $region177: #{downsample.1} parent=173 // loop_header_branch
                  %518 = sbr.rel (%p516) target = $region181
                $region178: #{downsample.1} parent=173 // loop_body
                  _
                $region179: #{downsample.1} parent=173 // loop_footer
                  %s519 = sadd.s32 1, %s515
                $region180: #{downsample.1} parent=173 // loop_footer_branch
                  %514 = sbr.rel target = $region176
                $region181: #{downsample.1} parent=173 // loop_exit
                  _
                %s523 = ssub.s32 16, 1
                loop: start=0, step=1, limit=1
                $region182: #{downsample.1} parent=173 // loop_pre_header
                  _
                $region183: #{downsample.1} parent=173 // loop_header
                  %s525 = sphi 0, %s529
                  %p526 = scmp.ge.s32.totalorder %s525, 1
                  %s530 = sphi %s487, %s487
                  %s531 = sphi %s483, %s483
                $region184: #{downsample.1} parent=173 // loop_header_branch
                  %528 = sbr.rel (%p526) target = $region188
                $region185: #{downsample.1} parent=173 // loop_body
                  %v532 = vld [vmem:[%s530] sm:%s523]
                  %533 = vst [vmem:[%s531] sm:%s523] %v532
                  %v534 = vld [vmem:[%s530 + $0x4] sm:%s523]
                  %535 = vst [vmem:[%s531 + $0x4] sm:%s523] %v534
                  %v536 = vld [vmem:[%s530 + $0x90] sm:%s523]
                  %537 = vst [vmem:[%s531 + $0x8] sm:%s523] %v536
                  %v538 = vld [vmem:[%s530 + $0x94] sm:%s523]
                  %539 = vst [vmem:[%s531 + $0xc] sm:%s523] %v538
                $region186: #{downsample.1} parent=173 // loop_footer
                  %s529 = sadd.s32 1, %s525
                $region187: #{downsample.1} parent=173 // loop_footer_branch
                  %524 = sbr.rel target = $region183
                $region188: #{downsample.1} parent=173 // loop_exit
                  _
              $region174: #{downsample.1} parent=158 // pred_fallthru
                _
            $region159: #{downsample.1} parent=154 // pred_fallthru
              _
            // Predicated region
            $region160: #{downsample.1} parent=154 // pred_check
              _
            $region161: #{downsample.1} parent=154 // pred_check_branch
              %493 = sbr.rel (0) target = $region163
            $region162: #{downsample.1} parent=154 // pred_region
              %s495 = ssub.s32 16, 1
              loop: start=0, step=1, limit=1
              $region164: #{downsample.1} parent=162 // loop_pre_header
                _
              $region165: #{downsample.1} parent=162 // loop_header
                %s497 = sphi 0, %s501
                %p498 = scmp.ge.s32.totalorder %s497, 1
                %s502 = sphi %s487, %s487
                %s503 = sphi %s483, %s483
              $region166: #{downsample.1} parent=162 // loop_header_branch
                %500 = sbr.rel (%p498) target = $region170
              $region167: #{downsample.1} parent=162 // loop_body
                %v504 = vld [vmem:[%s502] sm:%s495]
                %505 = vst [vmem:[%s503] sm:%s495] %v504
                %v506 = vld [vmem:[%s502 + $0x4] sm:%s495]
                %507 = vst [vmem:[%s503 + $0x4] sm:%s495] %v506
                %v508 = vld [vmem:[%s502 + $0x90] sm:%s495]
                %509 = vst [vmem:[%s503 + $0x8] sm:%s495] %v508
                %v510 = vld [vmem:[%s502 + $0x94] sm:%s495]
                %511 = vst [vmem:[%s503 + $0xc] sm:%s495] %v510
              $region168: #{downsample.1} parent=162 // loop_footer
                %s501 = sadd.s32 1, %s497
              $region169: #{downsample.1} parent=162 // loop_footer_branch
                %496 = sbr.rel target = $region165
              $region170: #{downsample.1} parent=162 // loop_exit
                _
            $region163: #{downsample.1} parent=154 // pred_fallthru
              _
          $region155: #{downsample.1} parent=150 // pred_fallthru
            _
          %540 = vnop
        $region151: #{downsample.1} parent=23 // pred_fallthru
          _
        // Predicated region
        $region189: #{downsample.1} parent=23 // pred_check
          %p541 = pneg %p154
        $region190: #{downsample.1} parent=23 // pred_check_branch
          %543 = sbr.rel (%p541) target = $region192
        $region191: #{downsample.1} parent=23 // pred_region
          %s544 = sand.u32 %s144, 1
          %s545 = sand.u32 %s144, 1
          %s546 = smul.addr %s545, 16
          %s547 = scalar_lea.vmem [#allocation6], %s546
          %s548 = smul.u32 %s14, 2
          %s549 = sadd.s32 %s548, 1
          %s550 = smul.addr %s549, 2
          %s551 = smul.addr %s550, 4
          %s552 = scalar_lea.vmem %s4, %s551
          // Predicated region
          $region193: #{downsample.1} parent=191 // pred_check
            _
          $region194: #{downsample.1} parent=191 // pred_check_branch
            %554 = sbr.rel (0) target = $region196
          $region195: #{downsample.1} parent=191 // pred_region
            // Predicated region
            $region197: #{downsample.1} parent=195 // pred_check
              _
            $region198: #{downsample.1} parent=195 // pred_check_branch
              %556 = sbr.rel target = $region200
            $region199: #{downsample.1} parent=195 // pred_region
              // Predicated region
              $region212: #{downsample.1} parent=199 // pred_check
                _
              $region213: #{downsample.1} parent=199 // pred_check_branch
                %578 = sbr.rel (0) target = $region215
              $region214: #{downsample.1} parent=199 // pred_region
                loop: start=0, step=1, limit=1
                $region216: #{downsample.1} parent=214 // loop_pre_header
                  _
                $region217: #{downsample.1} parent=214 // loop_header
                  %s580 = sphi 0, %s584
                  %p581 = scmp.ge.s32.totalorder %s580, 1
                  %s585 = sphi %s552, %s552
                  %s586 = sphi %s547, %s547
                $region218: #{downsample.1} parent=214 // loop_header_branch
                  %583 = sbr.rel (%p581) target = $region222
                $region219: #{downsample.1} parent=214 // loop_body
                  _
                $region220: #{downsample.1} parent=214 // loop_footer
                  %s584 = sadd.s32 1, %s580
                $region221: #{downsample.1} parent=214 // loop_footer_branch
                  %579 = sbr.rel target = $region217
                $region222: #{downsample.1} parent=214 // loop_exit
                  _
                %s588 = ssub.s32 16, 1
                loop: start=0, step=1, limit=1
                $region223: #{downsample.1} parent=214 // loop_pre_header
                  _
                $region224: #{downsample.1} parent=214 // loop_header
                  %s590 = sphi 0, %s594
                  %p591 = scmp.ge.s32.totalorder %s590, 1
                  %s595 = sphi %s552, %s552
                  %s596 = sphi %s547, %s547
                $region225: #{downsample.1} parent=214 // loop_header_branch
                  %593 = sbr.rel (%p591) target = $region229
                $region226: #{downsample.1} parent=214 // loop_body
                  %v597 = vld [vmem:[%s595] sm:%s588]
                  %598 = vst [vmem:[%s596] sm:%s588] %v597
                  %v599 = vld [vmem:[%s595 + $0x4] sm:%s588]
                  %600 = vst [vmem:[%s596 + $0x4] sm:%s588] %v599
                  %v601 = vld [vmem:[%s595 + $0x90] sm:%s588]
                  %602 = vst [vmem:[%s596 + $0x8] sm:%s588] %v601
                  %v603 = vld [vmem:[%s595 + $0x94] sm:%s588]
                  %604 = vst [vmem:[%s596 + $0xc] sm:%s588] %v603
                $region227: #{downsample.1} parent=214 // loop_footer
                  %s594 = sadd.s32 1, %s590
                $region228: #{downsample.1} parent=214 // loop_footer_branch
                  %589 = sbr.rel target = $region224
                $region229: #{downsample.1} parent=214 // loop_exit
                  _
              $region215: #{downsample.1} parent=199 // pred_fallthru
                _
            $region200: #{downsample.1} parent=195 // pred_fallthru
              _
            // Predicated region
            $region201: #{downsample.1} parent=195 // pred_check
              _
            $region202: #{downsample.1} parent=195 // pred_check_branch
              %558 = sbr.rel (0) target = $region204
            $region203: #{downsample.1} parent=195 // pred_region
              %s560 = ssub.s32 16, 1
              loop: start=0, step=1, limit=1
              $region205: #{downsample.1} parent=203 // loop_pre_header
                _
              $region206: #{downsample.1} parent=203 // loop_header
                %s562 = sphi 0, %s566
                %p563 = scmp.ge.s32.totalorder %s562, 1
                %s567 = sphi %s552, %s552
                %s568 = sphi %s547, %s547
              $region207: #{downsample.1} parent=203 // loop_header_branch
                %565 = sbr.rel (%p563) target = $region211
              $region208: #{downsample.1} parent=203 // loop_body
                %v569 = vld [vmem:[%s567] sm:%s560]
                %570 = vst [vmem:[%s568] sm:%s560] %v569
                %v571 = vld [vmem:[%s567 + $0x4] sm:%s560]
                %572 = vst [vmem:[%s568 + $0x4] sm:%s560] %v571
                %v573 = vld [vmem:[%s567 + $0x90] sm:%s560]
                %574 = vst [vmem:[%s568 + $0x8] sm:%s560] %v573
                %v575 = vld [vmem:[%s567 + $0x94] sm:%s560]
                %576 = vst [vmem:[%s568 + $0xc] sm:%s560] %v575
              $region209: #{downsample.1} parent=203 // loop_footer
                %s566 = sadd.s32 1, %s562
              $region210: #{downsample.1} parent=203 // loop_footer_branch
                %561 = sbr.rel target = $region206
              $region211: #{downsample.1} parent=203 // loop_exit
                _
            $region204: #{downsample.1} parent=195 // pred_fallthru
              _
          $region196: #{downsample.1} parent=191 // pred_fallthru
            _
          %605 = vnop
        $region192: #{downsample.1} parent=23 // pred_fallthru
          _
        // Predicated region
        $region230: #{downsample.1} parent=23 // pred_check
          %p606 = pneg %p184
        $region231: #{downsample.1} parent=23 // pred_check_branch
          %608 = sbr.rel (%p606) target = $region233
        $region232: #{downsample.1} parent=23 // pred_region
          %s609 = sand.u32 %s174, 1
          %s610 = sand.u32 %s174, 1
          %s611 = smul.addr %s610, 16
          %s612 = scalar_lea.vmem [#allocation7], %s611
          %s613 = smul.u32 %s14, 2
          %s614 = sadd.s32 %s613, 2
          %s615 = smul.addr %s614, 2
          %s616 = smul.addr %s615, 4
          %s617 = scalar_lea.vmem %s5, %s616
          // Predicated region
          $region234: #{downsample.1} parent=232 // pred_check
            _
          $region235: #{downsample.1} parent=232 // pred_check_branch
            %619 = sbr.rel (0) target = $region237
          $region236: #{downsample.1} parent=232 // pred_region
            // Predicated region
            $region238: #{downsample.1} parent=236 // pred_check
              _
            $region239: #{downsample.1} parent=236 // pred_check_branch
              %621 = sbr.rel target = $region241
            $region240: #{downsample.1} parent=236 // pred_region
              // Predicated region
              $region253: #{downsample.1} parent=240 // pred_check
                _
              $region254: #{downsample.1} parent=240 // pred_check_branch
                %643 = sbr.rel (0) target = $region256
              $region255: #{downsample.1} parent=240 // pred_region
                loop: start=0, step=1, limit=1
                $region257: #{downsample.1} parent=255 // loop_pre_header
                  _
                $region258: #{downsample.1} parent=255 // loop_header
                  %s645 = sphi 0, %s649
                  %p646 = scmp.ge.s32.totalorder %s645, 1
                  %s650 = sphi %s617, %s617
                  %s651 = sphi %s612, %s612
                $region259: #{downsample.1} parent=255 // loop_header_branch
                  %648 = sbr.rel (%p646) target = $region263
                $region260: #{downsample.1} parent=255 // loop_body
                  _
                $region261: #{downsample.1} parent=255 // loop_footer
                  %s649 = sadd.s32 1, %s645
                $region262: #{downsample.1} parent=255 // loop_footer_branch
                  %644 = sbr.rel target = $region258
                $region263: #{downsample.1} parent=255 // loop_exit
                  _
                %s653 = ssub.s32 16, 1
                loop: start=0, step=1, limit=1
                $region264: #{downsample.1} parent=255 // loop_pre_header
                  _
                $region265: #{downsample.1} parent=255 // loop_header
                  %s655 = sphi 0, %s659
                  %p656 = scmp.ge.s32.totalorder %s655, 1
                  %s660 = sphi %s617, %s617
                  %s661 = sphi %s612, %s612
                $region266: #{downsample.1} parent=255 // loop_header_branch
                  %658 = sbr.rel (%p656) target = $region270
                $region267: #{downsample.1} parent=255 // loop_body
                  %v662 = vld [vmem:[%s660] sm:%s653]
                  %663 = vst [vmem:[%s661] sm:%s653] %v662
                  %v664 = vld [vmem:[%s660 + $0x4] sm:%s653]
                  %665 = vst [vmem:[%s661 + $0x4] sm:%s653] %v664
                  %v666 = vld [vmem:[%s660 + $0x90] sm:%s653]
                  %667 = vst [vmem:[%s661 + $0x8] sm:%s653] %v666
                  %v668 = vld [vmem:[%s660 + $0x94] sm:%s653]
                  %669 = vst [vmem:[%s661 + $0xc] sm:%s653] %v668
                $region268: #{downsample.1} parent=255 // loop_footer
                  %s659 = sadd.s32 1, %s655
                $region269: #{downsample.1} parent=255 // loop_footer_branch
                  %654 = sbr.rel target = $region265
                $region270: #{downsample.1} parent=255 // loop_exit
                  _
              $region256: #{downsample.1} parent=240 // pred_fallthru
                _
            $region241: #{downsample.1} parent=236 // pred_fallthru
              _
            // Predicated region
            $region242: #{downsample.1} parent=236 // pred_check
              _
            $region243: #{downsample.1} parent=236 // pred_check_branch
              %623 = sbr.rel (0) target = $region245
            $region244: #{downsample.1} parent=236 // pred_region
              %s625 = ssub.s32 16, 1
              loop: start=0, step=1, limit=1
              $region246: #{downsample.1} parent=244 // loop_pre_header
                _
              $region247: #{downsample.1} parent=244 // loop_header
                %s627 = sphi 0, %s631
                %p628 = scmp.ge.s32.totalorder %s627, 1
                %s632 = sphi %s617, %s617
                %s633 = sphi %s612, %s612
              $region248: #{downsample.1} parent=244 // loop_header_branch
                %630 = sbr.rel (%p628) target = $region252
              $region249: #{downsample.1} parent=244 // loop_body
                %v634 = vld [vmem:[%s632] sm:%s625]
                %635 = vst [vmem:[%s633] sm:%s625] %v634
                %v636 = vld [vmem:[%s632 + $0x4] sm:%s625]
                %637 = vst [vmem:[%s633 + $0x4] sm:%s625] %v636
                %v638 = vld [vmem:[%s632 + $0x90] sm:%s625]
                %639 = vst [vmem:[%s633 + $0x8] sm:%s625] %v638
                %v640 = vld [vmem:[%s632 + $0x94] sm:%s625]
                %641 = vst [vmem:[%s633 + $0xc] sm:%s625] %v640
              $region250: #{downsample.1} parent=244 // loop_footer
                %s631 = sadd.s32 1, %s627
              $region251: #{downsample.1} parent=244 // loop_footer_branch
                %626 = sbr.rel target = $region247
              $region252: #{downsample.1} parent=244 // loop_exit
                _
            $region245: #{downsample.1} parent=236 // pred_fallthru
              _
          $region237: #{downsample.1} parent=232 // pred_fallthru
            _
          %670 = vnop
        $region233: #{downsample.1} parent=23 // pred_fallthru
          _
      $region24: #{downsample.1} parent=5 // pred_fallthru
        _
      %p671 = scmp.le.s32.totalorder 1, %s14
      %p672 = scmp.lt.s32.totalorder %s14, 9
      %p673 = pnand %p671, %p672
      %p674 = pneg %p673
      // Predicated region
      $region271: #{downsample.1} parent=5 // pred_check
        _
      $region272: #{downsample.1} parent=5 // pred_check_branch
        %676 = sbr.rel (%p673) target = $region274
      $region273: #{downsample.1} parent=5 // pred_region
        %s677 = ssub.s32 %s14, 1
        %s678 = sand.u32 %s29, 1
        %s679 = sand.u32 %s29, 1
        %s680 = smul.addr %s679, 16
        %s681 = scalar_lea.vmem [#allocation2], %s680
        // Predicated region
        $region275: #{downsample.1} parent=273 // pred_check
          %p682 = pneg %p42
        $region276: #{downsample.1} parent=273 // pred_check_branch
          %684 = sbr.rel (%p682) target = $region278
        $region277: #{downsample.1} parent=273 // pred_region
          _
        $region278: #{downsample.1} parent=273 // pred_fallthru
          _
        %s685 = sand.u32 %s59, 1
        %s686 = sand.u32 %s59, 1
        %s687 = smul.addr %s686, 16
        %s688 = scalar_lea.vmem [#allocation3], %s687
        // Predicated region
        $region279: #{downsample.1} parent=273 // pred_check
          %p689 = pneg %p72
        $region280: #{downsample.1} parent=273 // pred_check_branch
          %691 = sbr.rel (%p689) target = $region282
        $region281: #{downsample.1} parent=273 // pred_region
          _
        $region282: #{downsample.1} parent=273 // pred_fallthru
          _
        %s692 = sand.u32 %s89, 1
        %s693 = sand.u32 %s89, 1
        %s694 = smul.addr %s693, 16
        %s695 = scalar_lea.vmem [#allocation4], %s694
        // Predicated region
        $region283: #{downsample.1} parent=273 // pred_check
          %p696 = pneg %p102
        $region284: #{downsample.1} parent=273 // pred_check_branch
          %698 = sbr.rel (%p696) target = $region286
        $region285: #{downsample.1} parent=273 // pred_region
          _
        $region286: #{downsample.1} parent=273 // pred_fallthru
          _
        %s699 = sand.u32 %s117, 1
        %s700 = sand.u32 %s117, 1
        %s701 = smul.addr %s700, 16
        %s702 = scalar_lea.vmem [#allocation5], %s701
        // Predicated region
        $region287: #{downsample.1} parent=273 // pred_check
          %p703 = pneg %p130
        $region288: #{downsample.1} parent=273 // pred_check_branch
          %705 = sbr.rel (%p703) target = $region290
        $region289: #{downsample.1} parent=273 // pred_region
          _
        $region290: #{downsample.1} parent=273 // pred_fallthru
          _
        %s706 = sand.u32 %s147, 1
        %s707 = sand.u32 %s147, 1
        %s708 = smul.addr %s707, 16
        %s709 = scalar_lea.vmem [#allocation6], %s708
        // Predicated region
        $region291: #{downsample.1} parent=273 // pred_check
          %p710 = pneg %p160
        $region292: #{downsample.1} parent=273 // pred_check_branch
          %712 = sbr.rel (%p710) target = $region294
        $region293: #{downsample.1} parent=273 // pred_region
          _
        $region294: #{downsample.1} parent=273 // pred_fallthru
          _
        %s713 = sand.u32 %s177, 1
        %s714 = sand.u32 %s177, 1
        %s715 = smul.addr %s714, 16
        %s716 = scalar_lea.vmem [#allocation7], %s715
        // Predicated region
        $region295: #{downsample.1} parent=273 // pred_check
          %p717 = pneg %p190
        $region296: #{downsample.1} parent=273 // pred_check_branch
          %719 = sbr.rel (%p717) target = $region298
        $region297: #{downsample.1} parent=273 // pred_region
          _
        $region298: #{downsample.1} parent=273 // pred_fallthru
          _
        %s720 = sand.u32 %s29, 1
        %s721 = sand.u32 %s29, 1
        %s722 = smul.addr %s721, 16
        %s723 = scalar_lea.vmem [#allocation2], %s722
        %p724 = pneg %p42
        %p725 = pneg %p39
        %s726 = sand.u32 %s59, 1
        %s727 = sand.u32 %s59, 1
        %s728 = smul.addr %s727, 16
        %s729 = scalar_lea.vmem [#allocation3], %s728
        %p730 = pneg %p72
        %p731 = pneg %p69
        %s732 = sand.u32 %s89, 1
        %s733 = sand.u32 %s89, 1
        %s734 = smul.addr %s733, 16
        %s735 = scalar_lea.vmem [#allocation4], %s734
        %p736 = pneg %p102
        %p737 = pneg %p99
        %s738 = sand.u32 %s117, 1
        %s739 = sand.u32 %s117, 1
        %s740 = smul.addr %s739, 16
        %s741 = scalar_lea.vmem [#allocation5], %s740
        %p742 = pneg %p130
        %p743 = pneg %p127
        %s744 = sand.u32 %s147, 1
        %s745 = sand.u32 %s147, 1
        %s746 = smul.addr %s745, 16
        %s747 = scalar_lea.vmem [#allocation6], %s746
        %p748 = pneg %p160
        %p749 = pneg %p157
        %s750 = sand.u32 %s177, 1
        %s751 = sand.u32 %s177, 1
        %s752 = smul.addr %s751, 16
        %s753 = scalar_lea.vmem [#allocation7], %s752
        %p754 = pneg %p190
        %p755 = pneg %p187
        %p756 = pneg %p211
        %p757 = pneg %p208
        %p758 = pneg %p232
        %p759 = pneg %p229
        %p760 = pneg %p258
        %p761 = pneg %p255
        %s762 = sand.u32 %s245, 1
        %s763 = sand.u32 %s245, 1
        %s764 = smul.addr %s763, 16
        %s765 = scalar_lea.vmem [#allocation8], %s764
        %s766 = smul.u32 %s19, 2
        %s767 = smul.u32 %s19, 2
        %s768 = sadd.s32 %s767, 1
        %s769 = smul.u32 %s19, 2
        %s770 = sadd.s32 %s769, 2
        %s771 = smul.u32 %s19, 2
        %s772 = smul.u32 %s19, 2
        %s773 = sadd.s32 %s772, 1
        %s774 = smul.u32 %s19, 2
        %s775 = sadd.s32 %s774, 2
        %v777 = vld [vmem:[%s7] sm:$0x1]
        %v778 = vld [vmem:[%s681] sm:$0xf]
        %v779 = vld [vmem:[%s681 + $0x4] sm:$0x1]
        %v780 = vld [vmem:[%s702] sm:$0xf]
        %v781 = vld [vmem:[%s6] sm:$0x3]
        %s782 = scalar_lea.vmem %s6, 2
        %v783 = vld [vmem:[%s782] sm:$0x3]
        %vm784 = vcmask 31744
        %v786 = vsel %vm784, %v780, 0
        %vm788 = vcmask 1041408
        %v790 = vsel %vm788, %v783, 0
        %792 = vmatpush.bf16.msra.mxu0 0
        %793 = vmatpush.bf16.msra.mxu0 0
        %794 = vmatpush.bf16.msra.mxu0 0
        %795 = vmatpush.bf16.msra.mxu0 0
        %796 = vmatpush.bf16.msra.mxu0 0
        %797 = vmatpush.bf16.msra.mxu0 0
        %798 = vmatpush.bf16.msra.mxu0 0
        %799 = vmatpush.bf16.msra.mxu0 %v790
        %800 = vmatmul.bf16.gmra.mxu0 %v786
        %v801 = vpop.f32.mrf.mxu0
        %v802 = vadd.f32 0.0, %v801
        %v803 = vpop.f32.mrf.mxu0
        %804 = vdwg.mxu0
        %v806 = vsel %vm784, %v778, 0
        %v809 = vsel %vm788, %v781, 0
        %811 = vmatpush.bf16.msra.mxu0 0
        %812 = vmatpush.bf16.msra.mxu0 0
        %813 = vmatpush.bf16.msra.mxu0 0
        %814 = vmatpush.bf16.msra.mxu0 0
        %815 = vmatpush.bf16.msra.mxu0 0
        %816 = vmatpush.bf16.msra.mxu0 0
        %817 = vmatpush.bf16.msra.mxu0 0
        %818 = vmatpush.bf16.msra.mxu0 %v809
        %819 = vmatmul.bf16.gmra.mxu0 %v806
        %v820 = vpop.f32.mrf.mxu0
        %v821 = vadd.f32 %v802, %v820
        %v822 = vpop.f32.mrf.mxu0
        %823 = vdwg.mxu0
        %s824 = scalar_lea.vmem %s6, 4
        %v825 = vld [vmem:[%s824] sm:$0x3]
        %v828 = vunpack.c.l.b16 %v778
        %v829 = vunpack.c.l.b16 %v779
        %v830 = vpack.c.b16 %v829, %v828
        %v832 = vshrl.u32 %v830, 16
        %v834 = vshll.u32 %v830, 16
        %v836 = vrot.slane %v834, 1
        %v837 = vor.u32 %v832, %v836
        %v839 = vsel %vm784, %v837, 0
        %v842 = vsel %vm788, %v825, 0
        %844 = vmatpush.bf16.msra.mxu0 0
        %845 = vmatpush.bf16.msra.mxu0 0
        %846 = vmatpush.bf16.msra.mxu0 0
        %847 = vmatpush.bf16.msra.mxu0 0
        %848 = vmatpush.bf16.msra.mxu0 0
        %849 = vmatpush.bf16.msra.mxu0 0
        %850 = vmatpush.bf16.msra.mxu0 0
        %851 = vmatpush.bf16.msra.mxu0 %v842
        %852 = vmatmul.bf16.gmra.mxu0 %v839
        %v853 = vpop.f32.mrf.mxu0
        %v854 = vadd.f32 0.0, %v853
        %v855 = vpop.f32.mrf.mxu0
        %856 = vdwg.mxu0
        %v857 = vadd.f32 %v821, %v854
        %v858 = vld [vmem:[%s688] sm:$0xf]
        %v859 = vld [vmem:[%s688 + $0x4] sm:$0x1]
        %v860 = vld [vmem:[%s709] sm:$0xf]
        %s861 = scalar_lea.vmem %s6, 6
        %v862 = vld [vmem:[%s861] sm:$0x3]
        %v864 = vsel %vm784, %v858, 0
        %v867 = vsel %vm788, %v862, 0
        %869 = vmatpush.bf16.msra.mxu0 0
        %870 = vmatpush.bf16.msra.mxu0 0
        %871 = vmatpush.bf16.msra.mxu0 0
        %872 = vmatpush.bf16.msra.mxu0 0
        %873 = vmatpush.bf16.msra.mxu0 0
        %874 = vmatpush.bf16.msra.mxu0 0
        %875 = vmatpush.bf16.msra.mxu0 0
        %876 = vmatpush.bf16.msra.mxu0 %v867
        %877 = vmatmul.bf16.gmra.mxu0 %v864
        %v878 = vpop.f32.mrf.mxu0
        %v879 = vadd.f32 0.0, %v878
        %v880 = vpop.f32.mrf.mxu0
        %881 = vdwg.mxu0
        %v882 = vadd.f32 %v857, %v879
        %s883 = scalar_lea.vmem %s6, 8
        %v884 = vld [vmem:[%s883] sm:$0x3]
        %v886 = vsel %vm784, %v860, 0
        %v889 = vsel %vm788, %v884, 0
        %891 = vmatpush.bf16.msra.mxu0 0
        %892 = vmatpush.bf16.msra.mxu0 0
        %893 = vmatpush.bf16.msra.mxu0 0
        %894 = vmatpush.bf16.msra.mxu0 0
        %895 = vmatpush.bf16.msra.mxu0 0
        %896 = vmatpush.bf16.msra.mxu0 0
        %897 = vmatpush.bf16.msra.mxu0 0
        %898 = vmatpush.bf16.msra.mxu0 %v889
        %899 = vmatmul.bf16.gmra.mxu0 %v886
        %v900 = vpop.f32.mrf.mxu0
        %v901 = vadd.f32 0.0, %v900
        %v902 = vpop.f32.mrf.mxu0
        %903 = vdwg.mxu0
        %v904 = vadd.f32 %v882, %v901
        %s905 = scalar_lea.vmem %s6, 10
        %v906 = vld [vmem:[%s905] sm:$0x3]
        %v909 = vunpack.c.l.b16 %v858
        %v910 = vunpack.c.l.b16 %v859
        %v911 = vpack.c.b16 %v910, %v909
        %v913 = vshrl.u32 %v911, 16
        %v915 = vshll.u32 %v911, 16
        %v917 = vrot.slane %v915, 1
        %v918 = vor.u32 %v913, %v917
        %v920 = vsel %vm784, %v918, 0
        %v923 = vsel %vm788, %v906, 0
        %925 = vmatpush.bf16.msra.mxu0 0
        %926 = vmatpush.bf16.msra.mxu0 0
        %927 = vmatpush.bf16.msra.mxu0 0
        %928 = vmatpush.bf16.msra.mxu0 0
        %929 = vmatpush.bf16.msra.mxu0 0
        %930 = vmatpush.bf16.msra.mxu0 0
        %931 = vmatpush.bf16.msra.mxu0 0
        %932 = vmatpush.bf16.msra.mxu0 %v923
        %933 = vmatmul.bf16.gmra.mxu0 %v920
        %v934 = vpop.f32.mrf.mxu0
        %v935 = vadd.f32 0.0, %v934
        %v936 = vpop.f32.mrf.mxu0
        %937 = vdwg.mxu0
        %v938 = vadd.f32 %v904, %v935
        %v939 = vld [vmem:[%s695] sm:$0xf]
        %v940 = vld [vmem:[%s695 + $0x4] sm:$0x1]
        %v941 = vld [vmem:[%s716] sm:$0xf]
        %s942 = scalar_lea.vmem %s6, 12
        %v943 = vld [vmem:[%s942] sm:$0x3]
        %v945 = vsel %vm784, %v939, 0
        %v948 = vsel %vm788, %v943, 0
        %950 = vmatpush.bf16.msra.mxu0 0
        %951 = vmatpush.bf16.msra.mxu0 0
        %952 = vmatpush.bf16.msra.mxu0 0
        %953 = vmatpush.bf16.msra.mxu0 0
        %954 = vmatpush.bf16.msra.mxu0 0
        %955 = vmatpush.bf16.msra.mxu0 0
        %956 = vmatpush.bf16.msra.mxu0 0
        %957 = vmatpush.bf16.msra.mxu0 %v948
        %958 = vmatmul.bf16.gmra.mxu0 %v945
        %v959 = vpop.f32.mrf.mxu0
        %v960 = vadd.f32 0.0, %v959
        %v961 = vpop.f32.mrf.mxu0
        %962 = vdwg.mxu0
        %v963 = vadd.f32 %v938, %v960
        %s964 = scalar_lea.vmem %s6, 14
        %v965 = vld [vmem:[%s964] sm:$0x3]
        %v967 = vsel %vm784, %v941, 0
        %v970 = vsel %vm788, %v965, 0
        %972 = vmatpush.bf16.msra.mxu0 0
        %973 = vmatpush.bf16.msra.mxu0 0
        %974 = vmatpush.bf16.msra.mxu0 0
        %975 = vmatpush.bf16.msra.mxu0 0
        %976 = vmatpush.bf16.msra.mxu0 0
        %977 = vmatpush.bf16.msra.mxu0 0
        %978 = vmatpush.bf16.msra.mxu0 0
        %979 = vmatpush.bf16.msra.mxu0 %v970
        %980 = vmatmul.bf16.gmra.mxu0 %v967
        %v981 = vpop.f32.mrf.mxu0
        %v982 = vadd.f32 0.0, %v981
        %v983 = vpop.f32.mrf.mxu0
        %984 = vdwg.mxu0
        %v985 = vadd.f32 %v963, %v982
        %s986 = scalar_lea.vmem %s6, 16
        %v987 = vld [vmem:[%s986] sm:$0x3]
        %v990 = vunpack.c.l.b16 %v939
        %v991 = vunpack.c.l.b16 %v940
        %v992 = vpack.c.b16 %v991, %v990
        %v994 = vshrl.u32 %v992, 16
        %v996 = vshll.u32 %v992, 16
        %v998 = vrot.slane %v996, 1
        %v999 = vor.u32 %v994, %v998
        %v1001 = vsel %vm784, %v999, 0
        %v1004 = vsel %vm788, %v987, 0
        %1006 = vmatpush.bf16.msra.mxu0 0
        %1007 = vmatpush.bf16.msra.mxu0 0
        %1008 = vmatpush.bf16.msra.mxu0 0
        %1009 = vmatpush.bf16.msra.mxu0 0
        %1010 = vmatpush.bf16.msra.mxu0 0
        %1011 = vmatpush.bf16.msra.mxu0 0
        %1012 = vmatpush.bf16.msra.mxu0 0
        %1013 = vmatpush.bf16.msra.mxu0 %v1004
        %1014 = vmatmul.bf16.gmra.mxu0 %v1001
        %v1015 = vpop.f32.mrf.mxu0
        %v1016 = vadd.f32 0.0, %v1015
        %v1017 = vpop.f32.mrf.mxu0
        %1018 = vdwg.mxu0
        %v1019 = vadd.f32 %v985, %v1016
        %v1021 = vperm.slane %v777, 0
        %v1023 = vadd.f32 %v1019, %v1021
        %1024 = vst [vmem:[%s765] sm:$0xff] %v1023
        %s1025 = scalar_lea.vmem %s681, 8 [#allocation2]
        %v1026 = vld [vmem:[%s1025] sm:$0xf]
        %v1027 = vld [vmem:[%s1025 + $0x4] sm:$0x1]
        %s1028 = scalar_lea.vmem %s702, 8 [#allocation5]
        %v1029 = vld [vmem:[%s1028] sm:$0xf]
        %v1030 = vld [vmem:[%s6] sm:$0x3]
        %v1031 = vld [vmem:[%s782] sm:$0x3]
        %v1033 = vsel %vm784, %v1029, 0
        %v1036 = vsel %vm788, %v1031, 0
        %1038 = vmatpush.bf16.msra.mxu0 0
        %1039 = vmatpush.bf16.msra.mxu0 0
        %1040 = vmatpush.bf16.msra.mxu0 0
        %1041 = vmatpush.bf16.msra.mxu0 0
        %1042 = vmatpush.bf16.msra.mxu0 0
        %1043 = vmatpush.bf16.msra.mxu0 0
        %1044 = vmatpush.bf16.msra.mxu0 0
        %1045 = vmatpush.bf16.msra.mxu0 %v1036
        %1046 = vmatmul.bf16.gmra.mxu0 %v1033
        %v1047 = vpop.f32.mrf.mxu0
        %v1048 = vadd.f32 0.0, %v1047
        %v1049 = vpop.f32.mrf.mxu0
        %1050 = vdwg.mxu0
        %v1052 = vsel %vm784, %v1026, 0
        %v1055 = vsel %vm788, %v1030, 0
        %1057 = vmatpush.bf16.msra.mxu0 0
        %1058 = vmatpush.bf16.msra.mxu0 0
        %1059 = vmatpush.bf16.msra.mxu0 0
        %1060 = vmatpush.bf16.msra.mxu0 0
        %1061 = vmatpush.bf16.msra.mxu0 0
        %1062 = vmatpush.bf16.msra.mxu0 0
        %1063 = vmatpush.bf16.msra.mxu0 0
        %1064 = vmatpush.bf16.msra.mxu0 %v1055
        %1065 = vmatmul.bf16.gmra.mxu0 %v1052
        %v1066 = vpop.f32.mrf.mxu0
        %v1067 = vadd.f32 %v1048, %v1066
        %v1068 = vpop.f32.mrf.mxu0
        %1069 = vdwg.mxu0
        %v1070 = vld [vmem:[%s824] sm:$0x3]
        %v1073 = vunpack.c.l.b16 %v1026
        %v1074 = vunpack.c.l.b16 %v1027
        %v1075 = vpack.c.b16 %v1074, %v1073
        %v1077 = vshrl.u32 %v1075, 16
        %v1079 = vshll.u32 %v1075, 16
        %v1081 = vrot.slane %v1079, 1
        %v1082 = vor.u32 %v1077, %v1081
        %v1084 = vsel %vm784, %v1082, 0
        %v1087 = vsel %vm788, %v1070, 0
        %1089 = vmatpush.bf16.msra.mxu0 0
        %1090 = vmatpush.bf16.msra.mxu0 0
        %1091 = vmatpush.bf16.msra.mxu0 0
        %1092 = vmatpush.bf16.msra.mxu0 0
        %1093 = vmatpush.bf16.msra.mxu0 0
        %1094 = vmatpush.bf16.msra.mxu0 0
        %1095 = vmatpush.bf16.msra.mxu0 0
        %1096 = vmatpush.bf16.msra.mxu0 %v1087
        %1097 = vmatmul.bf16.gmra.mxu0 %v1084
        %v1098 = vpop.f32.mrf.mxu0
        %v1099 = vadd.f32 0.0, %v1098
        %v1100 = vpop.f32.mrf.mxu0
        %1101 = vdwg.mxu0
        %v1102 = vadd.f32 %v1067, %v1099
        %s1103 = scalar_lea.vmem %s688, 8 [#allocation3]
        %v1104 = vld [vmem:[%s1103] sm:$0xf]
        %v1105 = vld [vmem:[%s1103 + $0x4] sm:$0x1]
        %s1106 = scalar_lea.vmem %s709, 8 [#allocation6]
        %v1107 = vld [vmem:[%s1106] sm:$0xf]
        %v1108 = vld [vmem:[%s861] sm:$0x3]
        %v1110 = vsel %vm784, %v1104, 0
        %v1113 = vsel %vm788, %v1108, 0
        %1115 = vmatpush.bf16.msra.mxu0 0
        %1116 = vmatpush.bf16.msra.mxu0 0
        %1117 = vmatpush.bf16.msra.mxu0 0
        %1118 = vmatpush.bf16.msra.mxu0 0
        %1119 = vmatpush.bf16.msra.mxu0 0
        %1120 = vmatpush.bf16.msra.mxu0 0
        %1121 = vmatpush.bf16.msra.mxu0 0
        %1122 = vmatpush.bf16.msra.mxu0 %v1113
        %1123 = vmatmul.bf16.gmra.mxu0 %v1110
        %v1124 = vpop.f32.mrf.mxu0
        %v1125 = vadd.f32 0.0, %v1124
        %v1126 = vpop.f32.mrf.mxu0
        %1127 = vdwg.mxu0
        %v1128 = vadd.f32 %v1102, %v1125
        %v1129 = vld [vmem:[%s883] sm:$0x3]
        %v1131 = vsel %vm784, %v1107, 0
        %v1134 = vsel %vm788, %v1129, 0
        %1136 = vmatpush.bf16.msra.mxu0 0
        %1137 = vmatpush.bf16.msra.mxu0 0
        %1138 = vmatpush.bf16.msra.mxu0 0
        %1139 = vmatpush.bf16.msra.mxu0 0
        %1140 = vmatpush.bf16.msra.mxu0 0
        %1141 = vmatpush.bf16.msra.mxu0 0
        %1142 = vmatpush.bf16.msra.mxu0 0
        %1143 = vmatpush.bf16.msra.mxu0 %v1134
        %1144 = vmatmul.bf16.gmra.mxu0 %v1131
        %v1145 = vpop.f32.mrf.mxu0
        %v1146 = vadd.f32 0.0, %v1145
        %v1147 = vpop.f32.mrf.mxu0
        %1148 = vdwg.mxu0
        %v1149 = vadd.f32 %v1128, %v1146
        %v1150 = vld [vmem:[%s905] sm:$0x3]
        %v1153 = vunpack.c.l.b16 %v1104
        %v1154 = vunpack.c.l.b16 %v1105
        %v1155 = vpack.c.b16 %v1154, %v1153
        %v1157 = vshrl.u32 %v1155, 16
        %v1159 = vshll.u32 %v1155, 16
        %v1161 = vrot.slane %v1159, 1
        %v1162 = vor.u32 %v1157, %v1161
        %v1164 = vsel %vm784, %v1162, 0
        %v1167 = vsel %vm788, %v1150, 0
        %1169 = vmatpush.bf16.msra.mxu0 0
        %1170 = vmatpush.bf16.msra.mxu0 0
        %1171 = vmatpush.bf16.msra.mxu0 0
        %1172 = vmatpush.bf16.msra.mxu0 0
        %1173 = vmatpush.bf16.msra.mxu0 0
        %1174 = vmatpush.bf16.msra.mxu0 0
        %1175 = vmatpush.bf16.msra.mxu0 0
        %1176 = vmatpush.bf16.msra.mxu0 %v1167
        %1177 = vmatmul.bf16.gmra.mxu0 %v1164
        %v1178 = vpop.f32.mrf.mxu0
        %v1179 = vadd.f32 0.0, %v1178
        %v1180 = vpop.f32.mrf.mxu0
        %1181 = vdwg.mxu0
        %v1182 = vadd.f32 %v1149, %v1179
        %s1183 = scalar_lea.vmem %s695, 8 [#allocation4]
        %v1184 = vld [vmem:[%s1183] sm:$0xf]
        %v1185 = vld [vmem:[%s1183 + $0x4] sm:$0x1]
        %s1186 = scalar_lea.vmem %s716, 8 [#allocation7]
        %v1187 = vld [vmem:[%s1186] sm:$0xf]
        %v1188 = vld [vmem:[%s942] sm:$0x3]
        %v1190 = vsel %vm784, %v1184, 0
        %v1193 = vsel %vm788, %v1188, 0
        %1195 = vmatpush.bf16.msra.mxu0 0
        %1196 = vmatpush.bf16.msra.mxu0 0
        %1197 = vmatpush.bf16.msra.mxu0 0
        %1198 = vmatpush.bf16.msra.mxu0 0
        %1199 = vmatpush.bf16.msra.mxu0 0
        %1200 = vmatpush.bf16.msra.mxu0 0
        %1201 = vmatpush.bf16.msra.mxu0 0
        %1202 = vmatpush.bf16.msra.mxu0 %v1193
        %1203 = vmatmul.bf16.gmra.mxu0 %v1190
        %v1204 = vpop.f32.mrf.mxu0
        %v1205 = vadd.f32 0.0, %v1204
        %v1206 = vpop.f32.mrf.mxu0
        %1207 = vdwg.mxu0
        %v1208 = vadd.f32 %v1182, %v1205
        %v1209 = vld [vmem:[%s964] sm:$0x3]
        %v1211 = vsel %vm784, %v1187, 0
        %v1214 = vsel %vm788, %v1209, 0
        %1216 = vmatpush.bf16.msra.mxu0 0
        %1217 = vmatpush.bf16.msra.mxu0 0
        %1218 = vmatpush.bf16.msra.mxu0 0
        %1219 = vmatpush.bf16.msra.mxu0 0
        %1220 = vmatpush.bf16.msra.mxu0 0
        %1221 = vmatpush.bf16.msra.mxu0 0
        %1222 = vmatpush.bf16.msra.mxu0 0
        %1223 = vmatpush.bf16.msra.mxu0 %v1214
        %1224 = vmatmul.bf16.gmra.mxu0 %v1211
        %v1225 = vpop.f32.mrf.mxu0
        %v1226 = vadd.f32 0.0, %v1225
        %v1227 = vpop.f32.mrf.mxu0
        %1228 = vdwg.mxu0
        %v1229 = vadd.f32 %v1208, %v1226
        %v1230 = vld [vmem:[%s986] sm:$0x3]
        %v1233 = vunpack.c.l.b16 %v1184
        %v1234 = vunpack.c.l.b16 %v1185
        %v1235 = vpack.c.b16 %v1234, %v1233
        %v1237 = vshrl.u32 %v1235, 16
        %v1239 = vshll.u32 %v1235, 16
        %v1241 = vrot.slane %v1239, 1
        %v1242 = vor.u32 %v1237, %v1241
        %v1244 = vsel %vm784, %v1242, 0
        %v1247 = vsel %vm788, %v1230, 0
        %1249 = vmatpush.bf16.msra.mxu0 0
        %1250 = vmatpush.bf16.msra.mxu0 0
        %1251 = vmatpush.bf16.msra.mxu0 0
        %1252 = vmatpush.bf16.msra.mxu0 0
        %1253 = vmatpush.bf16.msra.mxu0 0
        %1254 = vmatpush.bf16.msra.mxu0 0
        %1255 = vmatpush.bf16.msra.mxu0 0
        %1256 = vmatpush.bf16.msra.mxu0 %v1247
        %1257 = vmatmul.bf16.gmra.mxu0 %v1244
        %v1258 = vpop.f32.mrf.mxu0
        %v1259 = vadd.f32 0.0, %v1258
        %v1260 = vpop.f32.mrf.mxu0
        %1261 = vdwg.mxu0
        %v1262 = vadd.f32 %v1229, %v1259
        %v1263 = vadd.f32 %v1262, %v1021
        %s1264 = scalar_lea.vmem %s765, 8 [#allocation8]
        %1265 = vst [vmem:[%s1264] sm:$0xff] %v1263
        %s1266 = sand.u32 %s245, 1
        %s1267 = sand.u32 %s245, 1
        %s1268 = smul.addr %s1267, 16
        %s1269 = scalar_lea.vmem [#allocation8], %s1268
        // Predicated region
        $region299: #{downsample.1} parent=273 // pred_check
          %p1270 = pneg %p255
        $region300: #{downsample.1} parent=273 // pred_check_branch
          %1272 = sbr.rel (%p1270) target = $region302
        $region301: #{downsample.1} parent=273 // pred_region
          %s1273 = smul.addr %s19, 8
          %s1274 = scalar_lea.vmem %s8, %s1273
          // Predicated region
          $region303: #{downsample.1} parent=301 // pred_check
            _
          $region304: #{downsample.1} parent=301 // pred_check_branch
            %1276 = sbr.rel (0) target = $region306
          $region305: #{downsample.1} parent=301 // pred_region
            // Predicated region
            $region307: #{downsample.1} parent=305 // pred_check
              _
            $region308: #{downsample.1} parent=305 // pred_check_branch
              %1278 = sbr.rel (0) target = $region310
            $region309: #{downsample.1} parent=305 // pred_region
              // Predicated region
              $region322: #{downsample.1} parent=309 // pred_check
                _
              $region323: #{downsample.1} parent=309 // pred_check_branch
                %1296 = sbr.rel (0) target = $region325
              $region324: #{downsample.1} parent=309 // pred_region
                loop: start=0, step=1, limit=1
                $region326: #{downsample.1} parent=324 // loop_pre_header
                  _
                $region327: #{downsample.1} parent=324 // loop_header
                  %s1298 = sphi 0, %s1302
                  %p1299 = scmp.ge.s32.totalorder %s1298, 1
                  %s1303 = sphi %s1269, %s1269
                  %s1304 = sphi %s1274, %s1274
                $region328: #{downsample.1} parent=324 // loop_header_branch
                  %1301 = sbr.rel (%p1299) target = $region332
                $region329: #{downsample.1} parent=324 // loop_body
                  %v1305 = vld [vmem:[%s1303] sm:$0xff]
                  %1306 = vst [vmem:[%s1304] sm:$0xff] %v1305
                  %v1307 = vld [vmem:[%s1303 + $0x8] sm:$0xff]
                  %1308 = vst [vmem:[%s1304 + $0x40] sm:$0xff] %v1307
                $region330: #{downsample.1} parent=324 // loop_footer
                  %s1302 = sadd.s32 1, %s1298
                $region331: #{downsample.1} parent=324 // loop_footer_branch
                  %1297 = sbr.rel target = $region327
                $region332: #{downsample.1} parent=324 // loop_exit
                  _
              $region325: #{downsample.1} parent=309 // pred_fallthru
                _
              // Predicated region
              $region333: #{downsample.1} parent=309 // pred_check
                _
              $region334: #{downsample.1} parent=309 // pred_check_branch
                %1310 = sbr.rel target = $region336
              $region335: #{downsample.1} parent=309 // pred_region
                _
              $region336: #{downsample.1} parent=309 // pred_fallthru
                _
            $region310: #{downsample.1} parent=305 // pred_fallthru
              _
            // Predicated region
            $region311: #{downsample.1} parent=305 // pred_check
              _
            $region312: #{downsample.1} parent=305 // pred_check_branch
              %1280 = sbr.rel target = $region314
            $region313: #{downsample.1} parent=305 // pred_region
              %s1282 = ssub.s32 256, 1
              loop: start=0, step=1, limit=1
              $region315: #{downsample.1} parent=313 // loop_pre_header
                _
              $region316: #{downsample.1} parent=313 // loop_header
                %s1284 = sphi 0, %s1288
                %p1285 = scmp.ge.s32.totalorder %s1284, 1
                %s1289 = sphi %s1269, %s1269
                %s1290 = sphi %s1274, %s1274
              $region317: #{downsample.1} parent=313 // loop_header_branch
                %1287 = sbr.rel (%p1285) target = $region321
              $region318: #{downsample.1} parent=313 // loop_body
                %v1291 = vld [vmem:[%s1289] sm:%s1282]
                %1292 = vst [vmem:[%s1290] sm:%s1282] %v1291
                %v1293 = vld [vmem:[%s1289 + $0x8] sm:%s1282]
                %1294 = vst [vmem:[%s1290 + $0x40] sm:%s1282] %v1293
              $region319: #{downsample.1} parent=313 // loop_footer
                %s1288 = sadd.s32 1, %s1284
              $region320: #{downsample.1} parent=313 // loop_footer_branch
                %1283 = sbr.rel target = $region316
              $region321: #{downsample.1} parent=313 // loop_exit
                _
            $region314: #{downsample.1} parent=305 // pred_fallthru
              _
          $region306: #{downsample.1} parent=301 // pred_fallthru
            _
          %1311 = vnop
        $region302: #{downsample.1} parent=273 // pred_fallthru
          _
      $region274: #{downsample.1} parent=5 // pred_fallthru
        _
      %p1312 = scmp.le.s32.totalorder 2, %s14
      // Predicated region
      $region337: #{downsample.1} parent=5 // pred_check
        %p1313 = pneg %p1312
      $region338: #{downsample.1} parent=5 // pred_check_branch
        %1315 = sbr.rel (%p1313) target = $region340
      $region339: #{downsample.1} parent=5 // pred_region
        %s1316 = ssub.s32 %s14, 2
        // Predicated region
        $region341: #{downsample.1} parent=339 // pred_check
          %p1317 = pneg %p261
        $region342: #{downsample.1} parent=339 // pred_check_branch
          %1319 = sbr.rel (%p1317) target = $region344
        $region343: #{downsample.1} parent=339 // pred_region
          %s1320 = sand.u32 %s246, 1
          %s1321 = sand.u32 %s246, 1
          %s1322 = smul.addr %s1321, 16
          %s1323 = scalar_lea.vmem [#allocation8], %s1322
        $region344: #{downsample.1} parent=339 // pred_fallthru
          _
      $region340: #{downsample.1} parent=5 // pred_fallthru
        _
    $region6: #{downsample.1} parent=1 // loop_footer
      %s18 = sadd.s32 1, %s14
    $region7: #{downsample.1} parent=1 // loop_footer_branch
      %13 = sbr.rel target = $region3
    $region8: #{downsample.1} parent=1 // loop_exit
      _

</llo_original>
